<compile_context>
chip_gen: v7x
topology: tpu7x:2x2x1
jax: 0.10.0
libtpu: 0.0.40
codegen_flags: <defaults>
</compile_context>

<pallas_src>
import jax
import jax.numpy as jnp
import numpy as np
from jax.experimental import pallas as pl
from jax.experimental.pallas import tpu as pltpu


def _round_up(x: int, m: int) -> int:
    return (x + m - 1) // m * m


# ----------------------------- Pallas kernel ---------------------------------

def _score_softmax_kernel(emb_ref, bias_ref, w_ref, out_ref):
    # emb_ref : (TB, S, H) bf16 -- BERT last_hidden_state tile
    # bias_ref: (TB, S)    f32  -- linear bias at kept positions, -inf at
    #                              pad / first-token / last-token positions
    # w_ref   : (1, H)     bf16 -- nn.Linear(H, 1) weight (grid-constant)
    # out_ref : (TB, S)    f32  -- softmax weights
    tb, s, h = emb_ref.shape

    # Hidden-dim contraction on the VPU.  Multiply in bf16 (native on v6e/v7x),
    # accumulate in f32.  Chunk H in <=128-lane slices so the f32 intermediate
    # (and the v5e compiler's f32 upcast of the multiply) stays bounded by
    # TB*S*128*4 bytes instead of TB*S*H*4.
    scores = bias_ref[...]                                    # (TB, S) f32
    for lo in range(0, h, 128):                               # static, <=6 for BERT
        hi = min(h, lo + 128)
        prod = emb_ref[:, :, lo:hi] * w_ref[:, lo:hi]         # bf16 (TB, S, ck)
        scores = scores + jnp.sum(prod.astype(jnp.float32), axis=-1)

    # Numerically stable softmax over the lane-dense sequence axis.
    # (Rows whose bias is entirely -inf -- i.e. padded batch rows -- produce
    #  NaN, exactly like the PyTorch reference would for an all-pad row; the
    #  wrapper slices padded rows off before returning.)
    m = jnp.max(scores, axis=-1, keepdims=True)
    e = jnp.exp(scores - m)
    denom = jnp.sum(e, axis=-1, keepdims=True)
    out_ref[...] = e * pl.reciprocal(denom, approx=True)


# ----------------------- per-generation tiling choice -------------------------

def _hw_params():
    """Returns (vmem_limit_bytes, multi_core) without hard-failing off-TPU."""
    kind = ""
    try:
        kind = jax.devices()[0].device_kind.lower()
    except Exception:
        pass
    multi_core = "7" in kind                    # v7x: 2 TensorCores per chip
    # Per-TensorCore VMEM: v5e/v6e 128 MiB, v7x 64 MiB.
    cap = 64 * 1024 * 1024 if multi_core else 128 * 1024 * 1024
    try:
        info = pltpu.get_tpu_info()
        v = int(getattr(info, "vmem_capacity_bytes", 0) or 0)
        if v > 0:
            cap = min(cap, v)
    except Exception:
        pass
    return int(cap * 0.8), multi_core           # leave ~20% headroom


def _pick_batch_tile(batch, s_pad, h, vmem_limit, multi_core):
    ck = min(h, 128)
    # Approximate VMEM bytes per batch row of one grid step: double-buffered
    # blocks + in-kernel temporaries.
    bytes_per_row = s_pad * (
        2 * h * 2          # bf16 embeddings block, 2 pipeline buffers
        + 2 * 4            # f32 score-bias block, 2 buffers
        + 2 * 4            # f32 output block, 2 buffers
        + ck * (2 + 4)     # chunked contraction temps (bf16 product + f32)
        + 6 * 4            # softmax temporaries
    )
    tb = max(8, (vmem_limit // max(bytes_per_row, 1)) // 8 * 8)
    b_ceil = _round_up(batch, 8)
    tb = min(tb, b_ceil)
    # On v7x keep >=2 grid steps so dimension_semantics=("parallel",) can shard
    # the batch axis across both TensorCores.
    if multi_core and b_ceil >= 16 and tb > b_ceil // 2:
        tb = max(8, (b_ceil // 2) // 8 * 8)
    return tb


# ------------------------------- wrapper --------------------------------------

def bert_weighted_forward(input_ids, attention_mask, params):
    """input_ids / attention_mask: (B, S) int arrays. Returns (B, S) f32 weights."""
    emb_table, w, b = params["emb_table"], params["w"], params["b"]
    B, S = input_ids.shape
    H = emb_table.shape[1]

    S_pad = _round_up(S, 128)                      # lane-dense output rows
    vmem_limit, multi_core = _hw_params()
    TB = _pick_batch_tile(B, S_pad, H, vmem_limit, multi_core)
    B_pad = _round_up(B, TB)

    # Pad only the tiny (B, S) id array; the stand-in gather then produces the
    # big activation tensor directly at (B_pad, S_pad, H) -- no extra full
    # (B, S, H) jnp.pad pass through HBM.
    ids_p = jnp.pad(input_ids, ((0, B_pad - B), (0, S_pad - S)))

    # TODO(synk): stand-in for the pretrained BERT encoder (no in-script Pallas
    # equivalent) -- last_hidden_state <- deterministic embedding lookup.  For
    # this stand-in the gather could itself be fused into the kernel via
    # PrefetchScalarGridSpec + a data-dependent index_map, but that is moot once
    # a real encoder produces the activations.
    embeddings = emb_table[ids_p].astype(jnp.bfloat16)        # (B_pad, S_pad, H)

    # Tiny (B, S) glue in plain JAX: pad + first/last kill mask, linear-bias fold.
    valid = attention_mask != 0
    idx = jnp.arange(S, dtype=jnp.int32)[None, :]
    first = jnp.min(jnp.where(valid, idx, S), axis=1, keepdims=True)
    last = jnp.max(jnp.where(valid, idx, -1), axis=1, keepdims=True)
    kill = (~valid) | (idx == first) | (idx == last)
    score_bias = jnp.where(
        kill, -jnp.inf, b.astype(jnp.float32).reshape(())).astype(jnp.float32)
    score_bias = jnp.pad(score_bias, ((0, B_pad - B), (0, S_pad - S)),
                         constant_values=-jnp.inf)            # padded -> exp()=0

    w_row = w.reshape(1, H).astype(jnp.bfloat16)

    out = pl.pallas_call(
        _score_softmax_kernel,
        out_shape=jax.ShapeDtypeStruct((B_pad, S_pad), jnp.float32),
        grid=(pl.cdiv(B_pad, TB),),
        in_specs=[
            pl.BlockSpec((TB, S_pad, H), lambda i: (i, 0, 0)),
            pl.BlockSpec((TB, S_pad), lambda i: (i, 0)),
            pl.BlockSpec((1, H), lambda i: (0, 0)),           # grid-constant weight
        ],
        out_specs=pl.BlockSpec((TB, S_pad), lambda i: (i, 0)),
        compiler_params=pltpu.CompilerParams(
            dimension_semantics=("parallel",),                # megacore-shard batch
            vmem_limit_bytes=vmem_limit,
        ),
    )(embeddings, score_bias, w_row)

    return out[:B, :S]


# ------------------------------ pure-jnp reference -----------------------------

def reference_forward(input_ids, attention_mask, params):
    """Pure-jnp reference replicating the PyTorch semantics (same bf16 inputs)."""
    emb = params["emb_table"][input_ids].astype(jnp.bfloat16).astype(jnp.float32)
    w = params["w"].astype(jnp.bfloat16).astype(jnp.float32)      # (1, H)
    scores = jnp.einsum("bsh,h->bs", emb, w[0]) + params["b"].reshape(())
    valid = attention_mask != 0
    S = attention_mask.shape[1]
    idx = jnp.arange(S, dtype=jnp.int32)[None, :]
    first = jnp.min(jnp.where(valid, idx, S), axis=1, keepdims=True)
    last = jnp.max(jnp.where(valid, idx, -1), axis=1, keepdims=True)
    kill = (~valid) | (idx == first) | (idx == last)
    scores = jnp.where(kill, -jnp.inf, scores)
    return jax.nn.softmax(scores, axis=-1)


if __name__ == "__main__":
    VOCAB, H = 50, 32
    key = jax.random.PRNGKey(0)
    k_emb, k_w, k_b, k_ids1, k_ids2 = jax.random.split(key, 5)

    params = {
        # deterministic stand-in for BERT's last_hidden_state producer
        "emb_table": jax.random.normal(k_emb, (VOCAB, H), dtype=jnp.float32) * 0.1,
        # nn.Linear(hidden_size, 1) weight / bias
        "w": jax.random.normal(k_w, (1, H), dtype=jnp.float32) * 0.05,
        "b": jax.random.normal(k_b, (1, 1), dtype=jnp.float32) * 0.05,
    }

    # Config A: the small shape implied by the module (batch=2, seq=8, hidden=32).
    B1, S1 = 2, 8
    ids1 = jax.random.randint(k_ids1, (B1, S1), 0, VOCAB, dtype=jnp.int32)
    mask1 = jnp.array([[1, 1, 1, 1, 1, 1, 0, 0],
                       [0, 1, 1, 1, 1, 0, 0, 0]], dtype=jnp.int32)  # incl. left padding

    # Config B: larger batch so the kernel can run a real multi-step grid.
    B2, S2 = 16, 8
    ids2 = jax.random.randint(k_ids2, (B2, S2), 0, VOCAB, dtype=jnp.int32)
    pos = jnp.arange(S2, dtype=jnp.int32)[None, :]
    starts = (jnp.arange(B2, dtype=jnp.int32) % 3)[:, None]
    lengths = (3 + (jnp.arange(B2, dtype=jnp.int32) % 4))[:, None]   # >= 3 valid tokens
    mask2 = ((pos >= starts) & (pos < starts + lengths)).astype(jnp.int32)

    for ids, mask in ((ids1, mask1), (ids2, mask2)):
        out = jax.block_until_ready(bert_weighted_forward(ids, mask, params))
        ref = jax.block_until_ready(reference_forward(ids, mask, params))
        # Tolerance covers bf16 multiplies + approx-EUP reciprocal in the kernel.
        np.testing.assert_allclose(np.asarray(out), np.asarray(ref),
                                   rtol=1e-2, atol=5e-4)

    print("KERNEL_OK")
</pallas_src>

<mosaic_0001>
module attributes {stable_mosaic.version = 11 : i64} {
  func.func @_score_softmax_kernel(%arg0: i32, %arg1: memref<8x128x32xbf16, #tpu.memory_space<vmem>>, %arg2: memref<8x128xf32, #tpu.memory_space<vmem>>, %arg3: memref<1x32xbf16, #tpu.memory_space<vmem>>, %arg4: memref<8x128xf32, #tpu.memory_space<vmem>>) attributes {dimension_semantics = [#tpu.dimension_semantics<parallel>], iteration_bounds = array<i64: 1>, scalar_prefetch = 0 : i64, scratch_operands = 0 : i64, tpu.core_type = #tpu.core_type<tc>, window_params = [{transform_indices = @transform_0, window_bounds = array<i64: 8, 128, 32>}, {transform_indices = @transform_1, window_bounds = array<i64: 8, 128>}, {pipeline_mode = #tpu.pipeline_mode<synchronous>, transform_indices = @transform_2, window_bounds = array<i64: 1, 32>}, {transform_indices = @transform_3, window_bounds = array<i64: 8, 128>}]} {
    %c0 = arith.constant 0 : index
    %c0_0 = arith.constant 0 : index
    %0 = vector.load %arg2[%c0, %c0_0] : memref<8x128xf32, #tpu.memory_space<vmem>>, vector<8x128xf32>
    %c0_1 = arith.constant 0 : index
    %c0_2 = arith.constant 0 : index
    %c0_3 = arith.constant 0 : index
    %1 = vector.load %arg1[%c0_1, %c0_2, %c0_3] : memref<8x128x32xbf16, #tpu.memory_space<vmem>>, vector<8x128x32xbf16>
    %c0_4 = arith.constant 0 : index
    %c0_5 = arith.constant 0 : index
    %2 = vector.load %arg3[%c0_4, %c0_5] : memref<1x32xbf16, #tpu.memory_space<vmem>>, vector<1x32xbf16>
    %3 = vector.shape_cast %2 : vector<1x32xbf16> to vector<1x1x32xbf16>
    %4 = vector.broadcast %3 : vector<1x1x32xbf16> to vector<8x128x32xbf16>
    %5 = arith.mulf %1, %4 : vector<8x128x32xbf16>
    %6 = arith.extf %5 : vector<8x128x32xbf16> to vector<8x128x32xf32>
    %cst = arith.constant dense<0.000000e+00> : vector<8x128xf32>
    %7 = vector.multi_reduction <add>, %6, %cst [2] : vector<8x128x32xf32> to vector<8x128xf32>
    %8 = arith.addf %0, %7 : vector<8x128xf32>
    %cst_6 = arith.constant dense<0xFF800000> : vector<8xf32>
    %9 = vector.multi_reduction <maximumf>, %8, %cst_6 [1] : vector<8x128xf32> to vector<8xf32>
    %10 = vector.shape_cast %9 : vector<8xf32> to vector<8x1xf32>
    %11 = vector.broadcast %10 : vector<8x1xf32> to vector<8x128xf32>
    %12 = arith.subf %8, %11 : vector<8x128xf32>
    %13 = math.exp %12 : vector<8x128xf32>
    %cst_7 = arith.constant dense<0.000000e+00> : vector<8xf32>
    %14 = vector.multi_reduction <add>, %13, %cst_7 [1] : vector<8x128xf32> to vector<8xf32>
    %15 = vector.shape_cast %14 : vector<8xf32> to vector<8x1xf32>
    %16 = tpu.reciprocal %15 {approx = true} : vector<8x1xf32> -> vector<8x1xf32>
    %17 = vector.broadcast %16 : vector<8x1xf32> to vector<8x128xf32>
    %18 = arith.mulf %13, %17 : vector<8x128xf32>
    %c0_8 = arith.constant 0 : index
    %c0_9 = arith.constant 0 : index
    %19 = vector.load %arg4[%c0_8, %c0_9] : memref<8x128xf32, #tpu.memory_space<vmem>>, vector<8x128xf32>
    tpu.vector_store %arg4[%c0_8, %c0_9], %18 {strides = array<i32>} : memref<8x128xf32, #tpu.memory_space<vmem>>, vector<8x128xf32>,
    return
  }
  func.func @transform_0(%arg0: i32) -> (i32, i32, i32) {
    %c0_i32 = arith.constant 0 : i32
    %c0_i32_0 = arith.constant 0 : i32
    %c0_i32_1 = arith.constant 0 : i32
    return %arg0, %c0_i32, %c0_i32_0 : i32, i32, i32
  }
  func.func @transform_1(%arg0: i32) -> (i32, i32) {
    %c0_i32 = arith.constant 0 : i32
    %c0_i32_0 = arith.constant 0 : i32
    return %arg0, %c0_i32 : i32, i32
  }
  func.func @transform_2(%arg0: i32) -> (i32, i32) {
    %c0_i32 = arith.constant 0 : i32
    %c0_i32_0 = arith.constant 0 : i32
    %c0_i32_1 = arith.constant 0 : i32
    return %c0_i32, %c0_i32_0 : i32, i32
  }
  func.func @transform_3(%arg0: i32) -> (i32, i32) {
    %c0_i32 = arith.constant 0 : i32
    %c0_i32_0 = arith.constant 0 : i32
    return %arg0, %c0_i32 : i32, i32
  }
}

</mosaic_0001>

<llo_original>
// kernel: tpu_custom_call.1
$region0: #{tpu_custom_call.1}
  #allocation0 [shape = 'u32[]', space=smem, size = 0x4, offset = 0x4, fixed_abs, tag = 'smem constant byte address 0x4 - core index']
  #allocation1 [shape = 'u32[144,128]{1,0:T(1,128)}', space=vmem, size = 0x12000, scoped, tag = 'internal scratch']
  %s0 = inlined_call_operand.hbm [shape: bf16[8,128,32], index: 0, kind: input, shape index: {}]
  %s1 = inlined_call_operand.hbm [shape: f32[8,128], index: 1, kind: input, shape index: {}]
  %s2 = inlined_call_operand.hbm [shape: bf16[1,32], index: 2, kind: input, shape index: {}]
  %s3 = inlined_call_operand.hbm [shape: f32[8,128], index: 3, kind: output, shape index: {}]
  %s4 = sld [smem:[#allocation0]]
  $region34: #{tpu_custom_call.1} parent=0
    _
  %s6 = ssub.s32 1, %s4
  %s7 = scalar_select 0, %s6, %s4
  $region1: #{tpu_custom_call.1} parent=0
    #allocation2 [shape = 'u8[262144]{0}', space=vmem, size = 0x40000, scoped, tag = 'input window, operand 0, single buffered']
    #allocation3 [shape = 's32[1]{0}', space=sflag, size = 0x4, scoped, tag = 'scoped memory for tpu_custom_call.1']
    #allocation4 [shape = 's32[1]{0}', space=sflag, size = 0x4, scoped, tag = 'scoped memory for tpu_custom_call.1']
    #allocation5 [shape = 'u8[4096]{0}', space=vmem, size = 0x1000, scoped, tag = 'input window, operand 1, single buffered']
    #allocation6 [shape = 's32[1]{0}', space=sflag, size = 0x4, scoped, tag = 'scoped memory for tpu_custom_call.1']
    #allocation7 [shape = 'u8[512]{0}', space=vmem, size = 0x400, scoped, tag = 'input window, operand 2, single buffered']
    #allocation8 [shape = 'u8[4096]{0}', space=vmem, size = 0x1000, scoped, tag = 'output window, operand 0, single buffered']
    %8 = vsyncpa [#allocation3], 0
    %9 = vsyncpa [#allocation6], 0
    %10 = vsyncpa [#allocation4], 0
    // Predicated region
    $region2: #{tpu_custom_call.1} parent=1 // pred_check
      _
    $region3: #{tpu_custom_call.1} parent=1 // pred_check_branch
      %12 = sbr.rel (0) target = $region5
    $region4: #{tpu_custom_call.1} parent=1 // pred_region
      %s14 = ssub.s32 8192, 8192
      %15 = vsyncadd [#allocation3], %s14
      %s16 = sshll.u32 [#allocation2], 4
      %s17 = int_to_ptr.vmem [resolvable:$true] %s16
      %22 = dma.hbm_to_vmem [thread:$0]  %s0, 8192, %s17, [#allocation3], 64, 64, 4
    $region5: #{tpu_custom_call.1} parent=1 // pred_fallthru
      _
    // Predicated region
    $region6: #{tpu_custom_call.1} parent=1 // pred_check
      _
    $region7: #{tpu_custom_call.1} parent=1 // pred_check_branch
      %24 = sbr.rel (0) target = $region9
    $region8: #{tpu_custom_call.1} parent=1 // pred_region
      %s26 = ssub.s32 128, 128
      %27 = vsyncadd [#allocation6], %s26
      %s29 = sshll.u32 [#allocation5], 4
      %s30 = int_to_ptr.vmem [resolvable:$true] %s29
      %32 = dma.hbm_to_vmem [thread:$0]  %s1, 128, %s30, [#allocation6]
    $region9: #{tpu_custom_call.1} parent=1 // pred_fallthru
      _
    // Predicated region
    $region10: #{tpu_custom_call.1} parent=1 // pred_check
      _
    $region11: #{tpu_custom_call.1} parent=1 // pred_check_branch
      %34 = sbr.rel (0) target = $region13
    $region12: #{tpu_custom_call.1} parent=1 // pred_region
      %s36 = ssub.s32 16, 16
      %37 = vsyncadd [#allocation6], %s36
      %s39 = sshll.u32 [#allocation7], 4
      %s40 = int_to_ptr.vmem [resolvable:$true] %s39
      %42 = dma.hbm_to_vmem [thread:$0]  %s2, 16, %s40, [#allocation6]
    $region13: #{tpu_custom_call.1} parent=1 // pred_fallthru
      _
    // Predicated region
    $region14: #{tpu_custom_call.1} parent=1 // pred_check
      _
    $region15: #{tpu_custom_call.1} parent=1 // pred_check_branch
      %44 = sbr.rel (0) target = $region17
    $region16: #{tpu_custom_call.1} parent=1 // pred_region
      %45 = dma.done [#allocation3], 8192
    $region17: #{tpu_custom_call.1} parent=1 // pred_fallthru
      _
    // Predicated region
    $region18: #{tpu_custom_call.1} parent=1 // pred_check
      _
    $region19: #{tpu_custom_call.1} parent=1 // pred_check_branch
      %47 = sbr.rel (0) target = $region21
    $region20: #{tpu_custom_call.1} parent=1 // pred_region
      %48 = dma.done [#allocation6], 128
    $region21: #{tpu_custom_call.1} parent=1 // pred_fallthru
      _
    // Predicated region
    $region22: #{tpu_custom_call.1} parent=1 // pred_check
      _
    $region23: #{tpu_custom_call.1} parent=1 // pred_check_branch
      %50 = sbr.rel (0) target = $region25
    $region24: #{tpu_custom_call.1} parent=1 // pred_region
      %51 = dma.done [#allocation6], 16
    $region25: #{tpu_custom_call.1} parent=1 // pred_fallthru
      _
    %v52 = vld [vmem:[#allocation5] sm:$0xff]
    %v53 = vld [vmem:[#allocation2] sm:$0xf]
    %v54 = vld [vmem:[#allocation2 + $0x4] sm:$0xf]
    %v55 = vld [vmem:[#allocation2 + $0x8] sm:$0xf]
    %v56 = vld [vmem:[#allocation2 + $0xc] sm:$0xf]
    %v57 = vld [vmem:[#allocation2 + $0x10] sm:$0xf]
    %v58 = vld [vmem:[#allocation2 + $0x14] sm:$0xf]
    %v59 = vld [vmem:[#allocation2 + $0x18] sm:$0xf]
    %v60 = vld [vmem:[#allocation2 + $0x1c] sm:$0xf]
    %v61 = vld [vmem:[#allocation2 + $0x20] sm:$0xf]
    %v62 = vld [vmem:[#allocation2 + $0x24] sm:$0xf]
    %v63 = vld [vmem:[#allocation2 + $0x28] sm:$0xf]
    %v64 = vld [vmem:[#allocation2 + $0x2c] sm:$0xf]
    %v65 = vld [vmem:[#allocation2 + $0x30] sm:$0xf]
    %v66 = vld [vmem:[#allocation2 + $0x34] sm:$0xf]
    %v67 = vld [vmem:[#allocation2 + $0x38] sm:$0xf]
    %v68 = vld [vmem:[#allocation2 + $0x3c] sm:$0xf]
    %v69 = vld [vmem:[#allocation2 + $0x40] sm:$0xf]
    %v70 = vld [vmem:[#allocation2 + $0x44] sm:$0xf]
    %v71 = vld [vmem:[#allocation2 + $0x48] sm:$0xf]
    %v72 = vld [vmem:[#allocation2 + $0x4c] sm:$0xf]
    %v73 = vld [vmem:[#allocation2 + $0x50] sm:$0xf]
    %v74 = vld [vmem:[#allocation2 + $0x54] sm:$0xf]
    %v75 = vld [vmem:[#allocation2 + $0x58] sm:$0xf]
    %v76 = vld [vmem:[#allocation2 + $0x5c] sm:$0xf]
    %v77 = vld [vmem:[#allocation2 + $0x60] sm:$0xf]
    %v78 = vld [vmem:[#allocation2 + $0x64] sm:$0xf]
    %v79 = vld [vmem:[#allocation2 + $0x68] sm:$0xf]
    %v80 = vld [vmem:[#allocation2 + $0x6c] sm:$0xf]
    %v81 = vld [vmem:[#allocation2 + $0x70] sm:$0xf]
    %v82 = vld [vmem:[#allocation2 + $0x74] sm:$0xf]
    %v83 = vld [vmem:[#allocation2 + $0x78] sm:$0xf]
    %v84 = vld [vmem:[#allocation2 + $0x7c] sm:$0xf]
    %v85 = vld [vmem:[#allocation2 + $0x80] sm:$0xf]
    %v86 = vld [vmem:[#allocation2 + $0x84] sm:$0xf]
    %v87 = vld [vmem:[#allocation2 + $0x88] sm:$0xf]
    %v88 = vld [vmem:[#allocation2 + $0x8c] sm:$0xf]
    %v89 = vld [vmem:[#allocation2 + $0x90] sm:$0xf]
    %v90 = vld [vmem:[#allocation2 + $0x94] sm:$0xf]
    %v91 = vld [vmem:[#allocation2 + $0x98] sm:$0xf]
    %v92 = vld [vmem:[#allocation2 + $0x9c] sm:$0xf]
    %v93 = vld [vmem:[#allocation2 + $0xa0] sm:$0xf]
    %v94 = vld [vmem:[#allocation2 + $0xa4] sm:$0xf]
    %v95 = vld [vmem:[#allocation2 + $0xa8] sm:$0xf]
    %v96 = vld [vmem:[#allocation2 + $0xac] sm:$0xf]
    %v97 = vld [vmem:[#allocation2 + $0xb0] sm:$0xf]
    %v98 = vld [vmem:[#allocation2 + $0xb4] sm:$0xf]
    %v99 = vld [vmem:[#allocation2 + $0xb8] sm:$0xf]
    %v100 = vld [vmem:[#allocation2 + $0xbc] sm:$0xf]
    %v101 = vld [vmem:[#allocation2 + $0xc0] sm:$0xf]
    %v102 = vld [vmem:[#allocation2 + $0xc4] sm:$0xf]
    %v103 = vld [vmem:[#allocation2 + $0xc8] sm:$0xf]
    %v104 = vld [vmem:[#allocation2 + $0xcc] sm:$0xf]
    %v105 = vld [vmem:[#allocation2 + $0xd0] sm:$0xf]
    %v106 = vld [vmem:[#allocation2 + $0xd4] sm:$0xf]
    %v107 = vld [vmem:[#allocation2 + $0xd8] sm:$0xf]
    %v108 = vld [vmem:[#allocation2 + $0xdc] sm:$0xf]
    %v109 = vld [vmem:[#allocation2 + $0xe0] sm:$0xf]
    %v110 = vld [vmem:[#allocation2 + $0xe4] sm:$0xf]
    %v111 = vld [vmem:[#allocation2 + $0xe8] sm:$0xf]
    %v112 = vld [vmem:[#allocation2 + $0xec] sm:$0xf]
    %v113 = vld [vmem:[#allocation2 + $0xf0] sm:$0xf]
    %v114 = vld [vmem:[#allocation2 + $0xf4] sm:$0xf]
    %v115 = vld [vmem:[#allocation2 + $0xf8] sm:$0xf]
    %v116 = vld [vmem:[#allocation2 + $0xfc] sm:$0xf]
    %v117 = vld [vmem:[#allocation2 + $0x100] sm:$0xf]
    %v118 = vld [vmem:[#allocation2 + $0x104] sm:$0xf]
    %v119 = vld [vmem:[#allocation2 + $0x108] sm:$0xf]
    %v120 = vld [vmem:[#allocation2 + $0x10c] sm:$0xf]
    %v121 = vld [vmem:[#allocation2 + $0x110] sm:$0xf]
    %v122 = vld [vmem:[#allocation2 + $0x114] sm:$0xf]
    %v123 = vld [vmem:[#allocation2 + $0x118] sm:$0xf]
    %v124 = vld [vmem:[#allocation2 + $0x11c] sm:$0xf]
    %v125 = vld [vmem:[#allocation2 + $0x120] sm:$0xf]
    %v126 = vld [vmem:[#allocation2 + $0x124] sm:$0xf]
    %v127 = vld [vmem:[#allocation2 + $0x128] sm:$0xf]
    %v128 = vld [vmem:[#allocation2 + $0x12c] sm:$0xf]
    %v129 = vld [vmem:[#allocation2 + $0x130] sm:$0xf]
    %v130 = vld [vmem:[#allocation2 + $0x134] sm:$0xf]
    %v131 = vld [vmem:[#allocation2 + $0x138] sm:$0xf]
    %v132 = vld [vmem:[#allocation2 + $0x13c] sm:$0xf]
    %v133 = vld [vmem:[#allocation2 + $0x140] sm:$0xf]
    %v134 = vld [vmem:[#allocation2 + $0x144] sm:$0xf]
    %v135 = vld [vmem:[#allocation2 + $0x148] sm:$0xf]
    %v136 = vld [vmem:[#allocation2 + $0x14c] sm:$0xf]
    %v137 = vld [vmem:[#allocation2 + $0x150] sm:$0xf]
    %v138 = vld [vmem:[#allocation2 + $0x154] sm:$0xf]
    %v139 = vld [vmem:[#allocation2 + $0x158] sm:$0xf]
    %v140 = vld [vmem:[#allocation2 + $0x15c] sm:$0xf]
    %v141 = vld [vmem:[#allocation2 + $0x160] sm:$0xf]
    %v142 = vld [vmem:[#allocation2 + $0x164] sm:$0xf]
    %v143 = vld [vmem:[#allocation2 + $0x168] sm:$0xf]
    %v144 = vld [vmem:[#allocation2 + $0x16c] sm:$0xf]
    %v145 = vld [vmem:[#allocation2 + $0x170] sm:$0xf]
    %v146 = vld [vmem:[#allocation2 + $0x174] sm:$0xf]
    %v147 = vld [vmem:[#allocation2 + $0x178] sm:$0xf]
    %v148 = vld [vmem:[#allocation2 + $0x17c] sm:$0xf]
    %v149 = vld [vmem:[#allocation2 + $0x180] sm:$0xf]
    %v150 = vld [vmem:[#allocation2 + $0x184] sm:$0xf]
    %v151 = vld [vmem:[#allocation2 + $0x188] sm:$0xf]
    %v152 = vld [vmem:[#allocation2 + $0x18c] sm:$0xf]
    %v153 = vld [vmem:[#allocation2 + $0x190] sm:$0xf]
    %v154 = vld [vmem:[#allocation2 + $0x194] sm:$0xf]
    %v155 = vld [vmem:[#allocation2 + $0x198] sm:$0xf]
    %v156 = vld [vmem:[#allocation2 + $0x19c] sm:$0xf]
    %v157 = vld [vmem:[#allocation2 + $0x1a0] sm:$0xf]
    %v158 = vld [vmem:[#allocation2 + $0x1a4] sm:$0xf]
    %v159 = vld [vmem:[#allocation2 + $0x1a8] sm:$0xf]
    %v160 = vld [vmem:[#allocation2 + $0x1ac] sm:$0xf]
    %v161 = vld [vmem:[#allocation2 + $0x1b0] sm:$0xf]
    %v162 = vld [vmem:[#allocation2 + $0x1b4] sm:$0xf]
    %v163 = vld [vmem:[#allocation2 + $0x1b8] sm:$0xf]
    %v164 = vld [vmem:[#allocation2 + $0x1bc] sm:$0xf]
    %v165 = vld [vmem:[#allocation2 + $0x1c0] sm:$0xf]
    %v166 = vld [vmem:[#allocation2 + $0x1c4] sm:$0xf]
    %v167 = vld [vmem:[#allocation2 + $0x1c8] sm:$0xf]
    %v168 = vld [vmem:[#allocation2 + $0x1cc] sm:$0xf]
    %v169 = vld [vmem:[#allocation2 + $0x1d0] sm:$0xf]
    %v170 = vld [vmem:[#allocation2 + $0x1d4] sm:$0xf]
    %v171 = vld [vmem:[#allocation2 + $0x1d8] sm:$0xf]
    %v172 = vld [vmem:[#allocation2 + $0x1dc] sm:$0xf]
    %v173 = vld [vmem:[#allocation2 + $0x1e0] sm:$0xf]
    %v174 = vld [vmem:[#allocation2 + $0x1e4] sm:$0xf]
    %v175 = vld [vmem:[#allocation2 + $0x1e8] sm:$0xf]
    %v176 = vld [vmem:[#allocation2 + $0x1ec] sm:$0xf]
    %v177 = vld [vmem:[#allocation2 + $0x1f0] sm:$0xf]
    %v178 = vld [vmem:[#allocation2 + $0x1f4] sm:$0xf]
    %v179 = vld [vmem:[#allocation2 + $0x1f8] sm:$0xf]
    %v180 = vld [vmem:[#allocation2 + $0x1fc] sm:$0xf]
    %v181 = vld [vmem:[#allocation7] sm:$0x1]
    %v183 = vpack.i.b16 %v181, %v181
    %v185 = vlaneseq
    %v186 = vshrl.u32 %v185, 7
    %v187 = vsub.s32 0, %v186
    %v188 = vrot.slane %v183, %v187
    %v190 = vunpack.c.l.b16 %v188
    %v191 = vpack.c.b16 %v190, %v190
    %v193 = vmul.bf16 %v53, %v191
    %v194 = vmul.bf16 %v54, %v191
    %v195 = vmul.bf16 %v55, %v191
    %v196 = vmul.bf16 %v56, %v191
    %v197 = vmul.bf16 %v57, %v191
    %v198 = vmul.bf16 %v58, %v191
    %v199 = vmul.bf16 %v59, %v191
    %v200 = vmul.bf16 %v60, %v191
    %v201 = vmul.bf16 %v61, %v191
    %v202 = vmul.bf16 %v62, %v191
    %v203 = vmul.bf16 %v63, %v191
    %v204 = vmul.bf16 %v64, %v191
    %v205 = vmul.bf16 %v65, %v191
    %v206 = vmul.bf16 %v66, %v191
    %v207 = vmul.bf16 %v67, %v191
    %v208 = vmul.bf16 %v68, %v191
    %v209 = vmul.bf16 %v69, %v191
    %v210 = vmul.bf16 %v70, %v191
    %v211 = vmul.bf16 %v71, %v191
    %v212 = vmul.bf16 %v72, %v191
    %v213 = vmul.bf16 %v73, %v191
    %v214 = vmul.bf16 %v74, %v191
    %v215 = vmul.bf16 %v75, %v191
    %v216 = vmul.bf16 %v76, %v191
    %v217 = vmul.bf16 %v77, %v191
    %v218 = vmul.bf16 %v78, %v191
    %v219 = vmul.bf16 %v79, %v191
    %v220 = vmul.bf16 %v80, %v191
    %v221 = vmul.bf16 %v81, %v191
    %v222 = vmul.bf16 %v82, %v191
    %v223 = vmul.bf16 %v83, %v191
    %v224 = vmul.bf16 %v84, %v191
    %v225 = vmul.bf16 %v85, %v191
    %v226 = vmul.bf16 %v86, %v191
    %v227 = vmul.bf16 %v87, %v191
    %v228 = vmul.bf16 %v88, %v191
    %v229 = vmul.bf16 %v89, %v191
    %v230 = vmul.bf16 %v90, %v191
    %v231 = vmul.bf16 %v91, %v191
    %v232 = vmul.bf16 %v92, %v191
    %v233 = vmul.bf16 %v93, %v191
    %v234 = vmul.bf16 %v94, %v191
    %v235 = vmul.bf16 %v95, %v191
    %v236 = vmul.bf16 %v96, %v191
    %v237 = vmul.bf16 %v97, %v191
    %v238 = vmul.bf16 %v98, %v191
    %v239 = vmul.bf16 %v99, %v191
    %v240 = vmul.bf16 %v100, %v191
    %v241 = vmul.bf16 %v101, %v191
    %v242 = vmul.bf16 %v102, %v191
    %v243 = vmul.bf16 %v103, %v191
    %v244 = vmul.bf16 %v104, %v191
    %v245 = vmul.bf16 %v105, %v191
    %v246 = vmul.bf16 %v106, %v191
    %v247 = vmul.bf16 %v107, %v191
    %v248 = vmul.bf16 %v108, %v191
    %v249 = vmul.bf16 %v109, %v191
    %v250 = vmul.bf16 %v110, %v191
    %v251 = vmul.bf16 %v111, %v191
    %v252 = vmul.bf16 %v112, %v191
    %v253 = vmul.bf16 %v113, %v191
    %v254 = vmul.bf16 %v114, %v191
    %v255 = vmul.bf16 %v115, %v191
    %v256 = vmul.bf16 %v116, %v191
    %v257 = vmul.bf16 %v117, %v191
    %v258 = vmul.bf16 %v118, %v191
    %v259 = vmul.bf16 %v119, %v191
    %v260 = vmul.bf16 %v120, %v191
    %v261 = vmul.bf16 %v121, %v191
    %v262 = vmul.bf16 %v122, %v191
    %v263 = vmul.bf16 %v123, %v191
    %v264 = vmul.bf16 %v124, %v191
    %v265 = vmul.bf16 %v125, %v191
    %v266 = vmul.bf16 %v126, %v191
    %v267 = vmul.bf16 %v127, %v191
    %v268 = vmul.bf16 %v128, %v191
    %v269 = vmul.bf16 %v129, %v191
    %v270 = vmul.bf16 %v130, %v191
    %v271 = vmul.bf16 %v131, %v191
    %v272 = vmul.bf16 %v132, %v191
    %v273 = vmul.bf16 %v133, %v191
    %v274 = vmul.bf16 %v134, %v191
    %v275 = vmul.bf16 %v135, %v191
    %v276 = vmul.bf16 %v136, %v191
    %v277 = vmul.bf16 %v137, %v191
    %v278 = vmul.bf16 %v138, %v191
    %v279 = vmul.bf16 %v139, %v191
    %v280 = vmul.bf16 %v140, %v191
    %v281 = vmul.bf16 %v141, %v191
    %v282 = vmul.bf16 %v142, %v191
    %v283 = vmul.bf16 %v143, %v191
    %v284 = vmul.bf16 %v144, %v191
    %v285 = vmul.bf16 %v145, %v191
    %v286 = vmul.bf16 %v146, %v191
    %v287 = vmul.bf16 %v147, %v191
    %v288 = vmul.bf16 %v148, %v191
    %v289 = vmul.bf16 %v149, %v191
    %v290 = vmul.bf16 %v150, %v191
    %v291 = vmul.bf16 %v151, %v191
    %v292 = vmul.bf16 %v152, %v191
    %v293 = vmul.bf16 %v153, %v191
    %v294 = vmul.bf16 %v154, %v191
    %v295 = vmul.bf16 %v155, %v191
    %v296 = vmul.bf16 %v156, %v191
    %v297 = vmul.bf16 %v157, %v191
    %v298 = vmul.bf16 %v158, %v191
    %v299 = vmul.bf16 %v159, %v191
    %v300 = vmul.bf16 %v160, %v191
    %v301 = vmul.bf16 %v161, %v191
    %v302 = vmul.bf16 %v162, %v191
    %v303 = vmul.bf16 %v163, %v191
    %v304 = vmul.bf16 %v164, %v191
    %v305 = vmul.bf16 %v165, %v191
    %v306 = vmul.bf16 %v166, %v191
    %v307 = vmul.bf16 %v167, %v191
    %v308 = vmul.bf16 %v168, %v191
    %v309 = vmul.bf16 %v169, %v191
    %v310 = vmul.bf16 %v170, %v191
    %v311 = vmul.bf16 %v171, %v191
    %v312 = vmul.bf16 %v172, %v191
    %v313 = vmul.bf16 %v173, %v191
    %v314 = vmul.bf16 %v174, %v191
    %v315 = vmul.bf16 %v175, %v191
    %v316 = vmul.bf16 %v176, %v191
    %v317 = vmul.bf16 %v177, %v191
    %v318 = vmul.bf16 %v178, %v191
    %v319 = vmul.bf16 %v179, %v191
    %v320 = vmul.bf16 %v180, %v191
    %v321 = vunpack.c.l.bf16 %v193
    %v322 = vunpack.c.l.bf16 %v194
    %v323 = vunpack.c.l.bf16 %v195
    %v324 = vunpack.c.l.bf16 %v196
    %v325 = vunpack.c.l.bf16 %v197
    %v326 = vunpack.c.l.bf16 %v198
    %v327 = vunpack.c.l.bf16 %v199
    %v328 = vunpack.c.l.bf16 %v200
    %v329 = vunpack.c.l.bf16 %v201
    %v330 = vunpack.c.l.bf16 %v202
    %v331 = vunpack.c.l.bf16 %v203
    %v332 = vunpack.c.l.bf16 %v204
    %v333 = vunpack.c.l.bf16 %v205
    %v334 = vunpack.c.l.bf16 %v206
    %v335 = vunpack.c.l.bf16 %v207
    %v336 = vunpack.c.l.bf16 %v208
    %v337 = vunpack.c.l.bf16 %v209
    %v338 = vunpack.c.l.bf16 %v210
    %v339 = vunpack.c.l.bf16 %v211
    %v340 = vunpack.c.l.bf16 %v212
    %v341 = vunpack.c.l.bf16 %v213
    %v342 = vunpack.c.l.bf16 %v214
    %v343 = vunpack.c.l.bf16 %v215
    %v344 = vunpack.c.l.bf16 %v216
    %v345 = vunpack.c.l.bf16 %v217
    %v346 = vunpack.c.l.bf16 %v218
    %v347 = vunpack.c.l.bf16 %v219
    %v348 = vunpack.c.l.bf16 %v220
    %v349 = vunpack.c.l.bf16 %v221
    %v350 = vunpack.c.l.bf16 %v222
    %v351 = vunpack.c.l.bf16 %v223
    %v352 = vunpack.c.l.bf16 %v224
    %v353 = vunpack.c.l.bf16 %v225
    %v354 = vunpack.c.l.bf16 %v226
    %v355 = vunpack.c.l.bf16 %v227
    %v356 = vunpack.c.l.bf16 %v228
    %v357 = vunpack.c.l.bf16 %v229
    %v358 = vunpack.c.l.bf16 %v230
    %v359 = vunpack.c.l.bf16 %v231
    %v360 = vunpack.c.l.bf16 %v232
    %v361 = vunpack.c.l.bf16 %v233
    %v362 = vunpack.c.l.bf16 %v234
    %v363 = vunpack.c.l.bf16 %v235
    %v364 = vunpack.c.l.bf16 %v236
    %v365 = vunpack.c.l.bf16 %v237
    %v366 = vunpack.c.l.bf16 %v238
    %v367 = vunpack.c.l.bf16 %v239
    %v368 = vunpack.c.l.bf16 %v240
    %v369 = vunpack.c.l.bf16 %v241
    %v370 = vunpack.c.l.bf16 %v242
    %v371 = vunpack.c.l.bf16 %v243
    %v372 = vunpack.c.l.bf16 %v244
    %v373 = vunpack.c.l.bf16 %v245
    %v374 = vunpack.c.l.bf16 %v246
    %v375 = vunpack.c.l.bf16 %v247
    %v376 = vunpack.c.l.bf16 %v248
    %v377 = vunpack.c.l.bf16 %v249
    %v378 = vunpack.c.l.bf16 %v250
    %v379 = vunpack.c.l.bf16 %v251
    %v380 = vunpack.c.l.bf16 %v252
    %v381 = vunpack.c.l.bf16 %v253
    %v382 = vunpack.c.l.bf16 %v254
    %v383 = vunpack.c.l.bf16 %v255
    %v384 = vunpack.c.l.bf16 %v256
    %v385 = vunpack.c.l.bf16 %v257
    %v386 = vunpack.c.l.bf16 %v258
    %v387 = vunpack.c.l.bf16 %v259
    %v388 = vunpack.c.l.bf16 %v260
    %v389 = vunpack.c.l.bf16 %v261
    %v390 = vunpack.c.l.bf16 %v262
    %v391 = vunpack.c.l.bf16 %v263
    %v392 = vunpack.c.l.bf16 %v264
    %v393 = vunpack.c.l.bf16 %v265
    %v394 = vunpack.c.l.bf16 %v266
    %v395 = vunpack.c.l.bf16 %v267
    %v396 = vunpack.c.l.bf16 %v268
    %v397 = vunpack.c.l.bf16 %v269
    %v398 = vunpack.c.l.bf16 %v270
    %v399 = vunpack.c.l.bf16 %v271
    %v400 = vunpack.c.l.bf16 %v272
    %v401 = vunpack.c.l.bf16 %v273
    %v402 = vunpack.c.l.bf16 %v274
    %v403 = vunpack.c.l.bf16 %v275
    %v404 = vunpack.c.l.bf16 %v276
    %v405 = vunpack.c.l.bf16 %v277
    %v406 = vunpack.c.l.bf16 %v278
    %v407 = vunpack.c.l.bf16 %v279
    %v408 = vunpack.c.l.bf16 %v280
    %v409 = vunpack.c.l.bf16 %v281
    %v410 = vunpack.c.l.bf16 %v282
    %v411 = vunpack.c.l.bf16 %v283
    %v412 = vunpack.c.l.bf16 %v284
    %v413 = vunpack.c.l.bf16 %v285
    %v414 = vunpack.c.l.bf16 %v286
    %v415 = vunpack.c.l.bf16 %v287
    %v416 = vunpack.c.l.bf16 %v288
    %v417 = vunpack.c.l.bf16 %v289
    %v418 = vunpack.c.l.bf16 %v290
    %v419 = vunpack.c.l.bf16 %v291
    %v420 = vunpack.c.l.bf16 %v292
    %v421 = vunpack.c.l.bf16 %v293
    %v422 = vunpack.c.l.bf16 %v294
    %v423 = vunpack.c.l.bf16 %v295
    %v424 = vunpack.c.l.bf16 %v296
    %v425 = vunpack.c.l.bf16 %v297
    %v426 = vunpack.c.l.bf16 %v298
    %v427 = vunpack.c.l.bf16 %v299
    %v428 = vunpack.c.l.bf16 %v300
    %v429 = vunpack.c.l.bf16 %v301
    %v430 = vunpack.c.l.bf16 %v302
    %v431 = vunpack.c.l.bf16 %v303
    %v432 = vunpack.c.l.bf16 %v304
    %v433 = vunpack.c.l.bf16 %v305
    %v434 = vunpack.c.l.bf16 %v306
    %v435 = vunpack.c.l.bf16 %v307
    %v436 = vunpack.c.l.bf16 %v308
    %v437 = vunpack.c.l.bf16 %v309
    %v438 = vunpack.c.l.bf16 %v310
    %v439 = vunpack.c.l.bf16 %v311
    %v440 = vunpack.c.l.bf16 %v312
    %v441 = vunpack.c.l.bf16 %v313
    %v442 = vunpack.c.l.bf16 %v314
    %v443 = vunpack.c.l.bf16 %v315
    %v444 = vunpack.c.l.bf16 %v316
    %v445 = vunpack.c.l.bf16 %v317
    %v446 = vunpack.c.l.bf16 %v318
    %v447 = vunpack.c.l.bf16 %v319
    %v448 = vunpack.c.l.bf16 %v320
    %vm449 = vcmask 261120
    %v450 = vsel %vm449, %v321, 0.0
    %451 = vadd.xlane.f32.xlu0 %v450
    %v452 = vpop.xlane.xlu0 %451
    %v453 = vsel %vm449, %v322, 0.0
    %454 = vadd.xlane.f32.xlu0 %v453
    %v455 = vpop.xlane.xlu0 %454
    %v456 = vsel %vm449, %v323, 0.0
    %457 = vadd.xlane.f32.xlu0 %v456
    %v458 = vpop.xlane.xlu0 %457
    %v459 = vsel %vm449, %v324, 0.0
    %460 = vadd.xlane.f32.xlu0 %v459
    %v461 = vpop.xlane.xlu0 %460
    %v462 = vsel %vm449, %v325, 0.0
    %463 = vadd.xlane.f32.xlu0 %v462
    %v464 = vpop.xlane.xlu0 %463
    %v465 = vsel %vm449, %v326, 0.0
    %466 = vadd.xlane.f32.xlu0 %v465
    %v467 = vpop.xlane.xlu0 %466
    %v468 = vsel %vm449, %v327, 0.0
    %469 = vadd.xlane.f32.xlu0 %v468
    %v470 = vpop.xlane.xlu0 %469
    %v471 = vsel %vm449, %v328, 0.0
    %472 = vadd.xlane.f32.xlu0 %v471
    %v473 = vpop.xlane.xlu0 %472
    %v474 = vsel %vm449, %v329, 0.0
    %475 = vadd.xlane.f32.xlu0 %v474
    %v476 = vpop.xlane.xlu0 %475
    %v477 = vsel %vm449, %v330, 0.0
    %478 = vadd.xlane.f32.xlu0 %v477
    %v479 = vpop.xlane.xlu0 %478
    %v480 = vsel %vm449, %v331, 0.0
    %481 = vadd.xlane.f32.xlu0 %v480
    %v482 = vpop.xlane.xlu0 %481
    %v483 = vsel %vm449, %v332, 0.0
    %484 = vadd.xlane.f32.xlu0 %v483
    %v485 = vpop.xlane.xlu0 %484
    %v486 = vsel %vm449, %v333, 0.0
    %487 = vadd.xlane.f32.xlu0 %v486
    %v488 = vpop.xlane.xlu0 %487
    %v489 = vsel %vm449, %v334, 0.0
    %490 = vadd.xlane.f32.xlu0 %v489
    %v491 = vpop.xlane.xlu0 %490
    %v492 = vsel %vm449, %v335, 0.0
    %493 = vadd.xlane.f32.xlu0 %v492
    %v494 = vpop.xlane.xlu0 %493
    %v495 = vsel %vm449, %v336, 0.0
    %496 = vadd.xlane.f32.xlu0 %v495
    %v497 = vpop.xlane.xlu0 %496
    %v498 = vsel %vm449, %v337, 0.0
    %499 = vadd.xlane.f32.xlu0 %v498
    %v500 = vpop.xlane.xlu0 %499
    %v501 = vsel %vm449, %v338, 0.0
    %502 = vadd.xlane.f32.xlu0 %v501
    %v503 = vpop.xlane.xlu0 %502
    %v504 = vsel %vm449, %v339, 0.0
    %505 = vadd.xlane.f32.xlu0 %v504
    %v506 = vpop.xlane.xlu0 %505
    %v507 = vsel %vm449, %v340, 0.0
    %508 = vadd.xlane.f32.xlu0 %v507
    %v509 = vpop.xlane.xlu0 %508
    %v510 = vsel %vm449, %v341, 0.0
    %511 = vadd.xlane.f32.xlu0 %v510
    %v512 = vpop.xlane.xlu0 %511
    %v513 = vsel %vm449, %v342, 0.0
    %514 = vadd.xlane.f32.xlu0 %v513
    %v515 = vpop.xlane.xlu0 %514
    %v516 = vsel %vm449, %v343, 0.0
    %517 = vadd.xlane.f32.xlu0 %v516
    %v518 = vpop.xlane.xlu0 %517
    %v519 = vsel %vm449, %v344, 0.0
    %520 = vadd.xlane.f32.xlu0 %v519
    %v521 = vpop.xlane.xlu0 %520
    %v522 = vsel %vm449, %v345, 0.0
    %523 = vadd.xlane.f32.xlu0 %v522
    %v524 = vpop.xlane.xlu0 %523
    %v525 = vsel %vm449, %v346, 0.0
    %526 = vadd.xlane.f32.xlu0 %v525
    %v527 = vpop.xlane.xlu0 %526
    %v528 = vsel %vm449, %v347, 0.0
    %529 = vadd.xlane.f32.xlu0 %v528
    %v530 = vpop.xlane.xlu0 %529
    %v531 = vsel %vm449, %v348, 0.0
    %532 = vadd.xlane.f32.xlu0 %v531
    %v533 = vpop.xlane.xlu0 %532
    %v534 = vsel %vm449, %v349, 0.0
    %535 = vadd.xlane.f32.xlu0 %v534
    %v536 = vpop.xlane.xlu0 %535
    %v537 = vsel %vm449, %v350, 0.0
    %538 = vadd.xlane.f32.xlu0 %v537
    %v539 = vpop.xlane.xlu0 %538
    %v540 = vsel %vm449, %v351, 0.0
    %541 = vadd.xlane.f32.xlu0 %v540
    %v542 = vpop.xlane.xlu0 %541
    %v543 = vsel %vm449, %v352, 0.0
    %544 = vadd.xlane.f32.xlu0 %v543
    %v545 = vpop.xlane.xlu0 %544
    %v546 = vsel %vm449, %v353, 0.0
    %547 = vadd.xlane.f32.xlu0 %v546
    %v548 = vpop.xlane.xlu0 %547
    %v549 = vsel %vm449, %v354, 0.0
    %550 = vadd.xlane.f32.xlu0 %v549
    %v551 = vpop.xlane.xlu0 %550
    %v552 = vsel %vm449, %v355, 0.0
    %553 = vadd.xlane.f32.xlu0 %v552
    %v554 = vpop.xlane.xlu0 %553
    %v555 = vsel %vm449, %v356, 0.0
    %556 = vadd.xlane.f32.xlu0 %v555
    %v557 = vpop.xlane.xlu0 %556
    %v558 = vsel %vm449, %v357, 0.0
    %559 = vadd.xlane.f32.xlu0 %v558
    %v560 = vpop.xlane.xlu0 %559
    %v561 = vsel %vm449, %v358, 0.0
    %562 = vadd.xlane.f32.xlu0 %v561
    %v563 = vpop.xlane.xlu0 %562
    %v564 = vsel %vm449, %v359, 0.0
    %565 = vadd.xlane.f32.xlu0 %v564
    %v566 = vpop.xlane.xlu0 %565
    %v567 = vsel %vm449, %v360, 0.0
    %568 = vadd.xlane.f32.xlu0 %v567
    %v569 = vpop.xlane.xlu0 %568
    %v570 = vsel %vm449, %v361, 0.0
    %571 = vadd.xlane.f32.xlu0 %v570
    %v572 = vpop.xlane.xlu0 %571
    %v573 = vsel %vm449, %v362, 0.0
    %574 = vadd.xlane.f32.xlu0 %v573
    %v575 = vpop.xlane.xlu0 %574
    %v576 = vsel %vm449, %v363, 0.0
    %577 = vadd.xlane.f32.xlu0 %v576
    %v578 = vpop.xlane.xlu0 %577
    %v579 = vsel %vm449, %v364, 0.0
    %580 = vadd.xlane.f32.xlu0 %v579
    %v581 = vpop.xlane.xlu0 %580
    %v582 = vsel %vm449, %v365, 0.0
    %583 = vadd.xlane.f32.xlu0 %v582
    %v584 = vpop.xlane.xlu0 %583
    %v585 = vsel %vm449, %v366, 0.0
    %586 = vadd.xlane.f32.xlu0 %v585
    %v587 = vpop.xlane.xlu0 %586
    %v588 = vsel %vm449, %v367, 0.0
    %589 = vadd.xlane.f32.xlu0 %v588
    %v590 = vpop.xlane.xlu0 %589
    %v591 = vsel %vm449, %v368, 0.0
    %592 = vadd.xlane.f32.xlu0 %v591
    %v593 = vpop.xlane.xlu0 %592
    %v594 = vsel %vm449, %v369, 0.0
    %595 = vadd.xlane.f32.xlu0 %v594
    %v596 = vpop.xlane.xlu0 %595
    %v597 = vsel %vm449, %v370, 0.0
    %598 = vadd.xlane.f32.xlu0 %v597
    %v599 = vpop.xlane.xlu0 %598
    %v600 = vsel %vm449, %v371, 0.0
    %601 = vadd.xlane.f32.xlu0 %v600
    %v602 = vpop.xlane.xlu0 %601
    %v603 = vsel %vm449, %v372, 0.0
    %604 = vadd.xlane.f32.xlu0 %v603
    %v605 = vpop.xlane.xlu0 %604
    %v606 = vsel %vm449, %v373, 0.0
    %607 = vadd.xlane.f32.xlu0 %v606
    %v608 = vpop.xlane.xlu0 %607
    %v609 = vsel %vm449, %v374, 0.0
    %610 = vadd.xlane.f32.xlu0 %v609
    %v611 = vpop.xlane.xlu0 %610
    %v612 = vsel %vm449, %v375, 0.0
    %613 = vadd.xlane.f32.xlu0 %v612
    %v614 = vpop.xlane.xlu0 %613
    %v615 = vsel %vm449, %v376, 0.0
    %616 = vadd.xlane.f32.xlu0 %v615
    %v617 = vpop.xlane.xlu0 %616
    %v618 = vsel %vm449, %v377, 0.0
    %619 = vadd.xlane.f32.xlu0 %v618
    %v620 = vpop.xlane.xlu0 %619
    %v621 = vsel %vm449, %v378, 0.0
    %622 = vadd.xlane.f32.xlu0 %v621
    %v623 = vpop.xlane.xlu0 %622
    %v624 = vsel %vm449, %v379, 0.0
    %625 = vadd.xlane.f32.xlu0 %v624
    %v626 = vpop.xlane.xlu0 %625
    %v627 = vsel %vm449, %v380, 0.0
    %628 = vadd.xlane.f32.xlu0 %v627
    %v629 = vpop.xlane.xlu0 %628
    %v630 = vsel %vm449, %v381, 0.0
    %631 = vadd.xlane.f32.xlu0 %v630
    %v632 = vpop.xlane.xlu0 %631
    %v633 = vsel %vm449, %v382, 0.0
    %634 = vadd.xlane.f32.xlu0 %v633
    %v635 = vpop.xlane.xlu0 %634
    %v636 = vsel %vm449, %v383, 0.0
    %637 = vadd.xlane.f32.xlu0 %v636
    %v638 = vpop.xlane.xlu0 %637
    %v639 = vsel %vm449, %v384, 0.0
    %640 = vadd.xlane.f32.xlu0 %v639
    %v641 = vpop.xlane.xlu0 %640
    %v642 = vsel %vm449, %v385, 0.0
    %643 = vadd.xlane.f32.xlu0 %v642
    %v644 = vpop.xlane.xlu0 %643
    %v645 = vsel %vm449, %v386, 0.0
    %646 = vadd.xlane.f32.xlu0 %v645
    %v647 = vpop.xlane.xlu0 %646
    %v648 = vsel %vm449, %v387, 0.0
    %649 = vadd.xlane.f32.xlu0 %v648
    %v650 = vpop.xlane.xlu0 %649
    %v651 = vsel %vm449, %v388, 0.0
    %652 = vadd.xlane.f32.xlu0 %v651
    %v653 = vpop.xlane.xlu0 %652
    %v654 = vsel %vm449, %v389, 0.0
    %655 = vadd.xlane.f32.xlu0 %v654
    %v656 = vpop.xlane.xlu0 %655
    %v657 = vsel %vm449, %v390, 0.0
    %658 = vadd.xlane.f32.xlu0 %v657
    %v659 = vpop.xlane.xlu0 %658
    %v660 = vsel %vm449, %v391, 0.0
    %661 = vadd.xlane.f32.xlu0 %v660
    %v662 = vpop.xlane.xlu0 %661
    %v663 = vsel %vm449, %v392, 0.0
    %664 = vadd.xlane.f32.xlu0 %v663
    %v665 = vpop.xlane.xlu0 %664
    %v666 = vsel %vm449, %v393, 0.0
    %667 = vadd.xlane.f32.xlu0 %v666
    %v668 = vpop.xlane.xlu0 %667
    %v669 = vsel %vm449, %v394, 0.0
    %670 = vadd.xlane.f32.xlu0 %v669
    %v671 = vpop.xlane.xlu0 %670
    %v672 = vsel %vm449, %v395, 0.0
    %673 = vadd.xlane.f32.xlu0 %v672
    %v674 = vpop.xlane.xlu0 %673
    %v675 = vsel %vm449, %v396, 0.0
    %676 = vadd.xlane.f32.xlu0 %v675
    %v677 = vpop.xlane.xlu0 %676
    %v678 = vsel %vm449, %v397, 0.0
    %679 = vadd.xlane.f32.xlu0 %v678
    %v680 = vpop.xlane.xlu0 %679
    %v681 = vsel %vm449, %v398, 0.0
    %682 = vadd.xlane.f32.xlu0 %v681
    %v683 = vpop.xlane.xlu0 %682
    %v684 = vsel %vm449, %v399, 0.0
    %685 = vadd.xlane.f32.xlu0 %v684
    %v686 = vpop.xlane.xlu0 %685
    %v687 = vsel %vm449, %v400, 0.0
    %688 = vadd.xlane.f32.xlu0 %v687
    %v689 = vpop.xlane.xlu0 %688
    %v690 = vsel %vm449, %v401, 0.0
    %691 = vadd.xlane.f32.xlu0 %v690
    %v692 = vpop.xlane.xlu0 %691
    %v693 = vsel %vm449, %v402, 0.0
    %694 = vadd.xlane.f32.xlu0 %v693
    %v695 = vpop.xlane.xlu0 %694
    %v696 = vsel %vm449, %v403, 0.0
    %697 = vadd.xlane.f32.xlu0 %v696
    %v698 = vpop.xlane.xlu0 %697
    %v699 = vsel %vm449, %v404, 0.0
    %700 = vadd.xlane.f32.xlu0 %v699
    %v701 = vpop.xlane.xlu0 %700
    %v702 = vsel %vm449, %v405, 0.0
    %703 = vadd.xlane.f32.xlu0 %v702
    %v704 = vpop.xlane.xlu0 %703
    %v705 = vsel %vm449, %v406, 0.0
    %706 = vadd.xlane.f32.xlu0 %v705
    %v707 = vpop.xlane.xlu0 %706
    %v708 = vsel %vm449, %v407, 0.0
    %709 = vadd.xlane.f32.xlu0 %v708
    %v710 = vpop.xlane.xlu0 %709
    %v711 = vsel %vm449, %v408, 0.0
    %712 = vadd.xlane.f32.xlu0 %v711
    %v713 = vpop.xlane.xlu0 %712
    %v714 = vsel %vm449, %v409, 0.0
    %715 = vadd.xlane.f32.xlu0 %v714
    %v716 = vpop.xlane.xlu0 %715
    %v717 = vsel %vm449, %v410, 0.0
    %718 = vadd.xlane.f32.xlu0 %v717
    %v719 = vpop.xlane.xlu0 %718
    %v720 = vsel %vm449, %v411, 0.0
    %721 = vadd.xlane.f32.xlu0 %v720
    %v722 = vpop.xlane.xlu0 %721
    %v723 = vsel %vm449, %v412, 0.0
    %724 = vadd.xlane.f32.xlu0 %v723
    %v725 = vpop.xlane.xlu0 %724
    %v726 = vsel %vm449, %v413, 0.0
    %727 = vadd.xlane.f32.xlu0 %v726
    %v728 = vpop.xlane.xlu0 %727
    %v729 = vsel %vm449, %v414, 0.0
    %730 = vadd.xlane.f32.xlu0 %v729
    %v731 = vpop.xlane.xlu0 %730
    %v732 = vsel %vm449, %v415, 0.0
    %733 = vadd.xlane.f32.xlu0 %v732
    %v734 = vpop.xlane.xlu0 %733
    %v735 = vsel %vm449, %v416, 0.0
    %736 = vadd.xlane.f32.xlu0 %v735
    %v737 = vpop.xlane.xlu0 %736
    %v738 = vsel %vm449, %v417, 0.0
    %739 = vadd.xlane.f32.xlu0 %v738
    %v740 = vpop.xlane.xlu0 %739
    %v741 = vsel %vm449, %v418, 0.0
    %742 = vadd.xlane.f32.xlu0 %v741
    %v743 = vpop.xlane.xlu0 %742
    %v744 = vsel %vm449, %v419, 0.0
    %745 = vadd.xlane.f32.xlu0 %v744
    %v746 = vpop.xlane.xlu0 %745
    %v747 = vsel %vm449, %v420, 0.0
    %748 = vadd.xlane.f32.xlu0 %v747
    %v749 = vpop.xlane.xlu0 %748
    %v750 = vsel %vm449, %v421, 0.0
    %751 = vadd.xlane.f32.xlu0 %v750
    %v752 = vpop.xlane.xlu0 %751
    %v753 = vsel %vm449, %v422, 0.0
    %754 = vadd.xlane.f32.xlu0 %v753
    %v755 = vpop.xlane.xlu0 %754
    %v756 = vsel %vm449, %v423, 0.0
    %757 = vadd.xlane.f32.xlu0 %v756
    %v758 = vpop.xlane.xlu0 %757
    %v759 = vsel %vm449, %v424, 0.0
    %760 = vadd.xlane.f32.xlu0 %v759
    %v761 = vpop.xlane.xlu0 %760
    %v762 = vsel %vm449, %v425, 0.0
    %763 = vadd.xlane.f32.xlu0 %v762
    %v764 = vpop.xlane.xlu0 %763
    %v765 = vsel %vm449, %v426, 0.0
    %766 = vadd.xlane.f32.xlu0 %v765
    %v767 = vpop.xlane.xlu0 %766
    %v768 = vsel %vm449, %v427, 0.0
    %769 = vadd.xlane.f32.xlu0 %v768
    %v770 = vpop.xlane.xlu0 %769
    %v771 = vsel %vm449, %v428, 0.0
    %772 = vadd.xlane.f32.xlu0 %v771
    %v773 = vpop.xlane.xlu0 %772
    %v774 = vsel %vm449, %v429, 0.0
    %775 = vadd.xlane.f32.xlu0 %v774
    %v776 = vpop.xlane.xlu0 %775
    %v777 = vsel %vm449, %v430, 0.0
    %778 = vadd.xlane.f32.xlu0 %v777
    %v779 = vpop.xlane.xlu0 %778
    %v780 = vsel %vm449, %v431, 0.0
    %781 = vadd.xlane.f32.xlu0 %v780
    %v782 = vpop.xlane.xlu0 %781
    %v783 = vsel %vm449, %v432, 0.0
    %784 = vadd.xlane.f32.xlu0 %v783
    %v785 = vpop.xlane.xlu0 %784
    %v786 = vsel %vm449, %v433, 0.0
    %787 = vadd.xlane.f32.xlu0 %v786
    %v788 = vpop.xlane.xlu0 %787
    %v789 = vsel %vm449, %v434, 0.0
    %790 = vadd.xlane.f32.xlu0 %v789
    %v791 = vpop.xlane.xlu0 %790
    %v792 = vsel %vm449, %v435, 0.0
    %793 = vadd.xlane.f32.xlu0 %v792
    %v794 = vpop.xlane.xlu0 %793
    %v795 = vsel %vm449, %v436, 0.0
    %796 = vadd.xlane.f32.xlu0 %v795
    %v797 = vpop.xlane.xlu0 %796
    %v798 = vsel %vm449, %v437, 0.0
    %799 = vadd.xlane.f32.xlu0 %v798
    %v800 = vpop.xlane.xlu0 %799
    %v801 = vsel %vm449, %v438, 0.0
    %802 = vadd.xlane.f32.xlu0 %v801
    %v803 = vpop.xlane.xlu0 %802
    %v804 = vsel %vm449, %v439, 0.0
    %805 = vadd.xlane.f32.xlu0 %v804
    %v806 = vpop.xlane.xlu0 %805
    %v807 = vsel %vm449, %v440, 0.0
    %808 = vadd.xlane.f32.xlu0 %v807
    %v809 = vpop.xlane.xlu0 %808
    %v810 = vsel %vm449, %v441, 0.0
    %811 = vadd.xlane.f32.xlu0 %v810
    %v812 = vpop.xlane.xlu0 %811
    %v813 = vsel %vm449, %v442, 0.0
    %814 = vadd.xlane.f32.xlu0 %v813
    %v815 = vpop.xlane.xlu0 %814
    %v816 = vsel %vm449, %v443, 0.0
    %817 = vadd.xlane.f32.xlu0 %v816
    %v818 = vpop.xlane.xlu0 %817
    %v819 = vsel %vm449, %v444, 0.0
    %820 = vadd.xlane.f32.xlu0 %v819
    %v821 = vpop.xlane.xlu0 %820
    %v822 = vsel %vm449, %v445, 0.0
    %823 = vadd.xlane.f32.xlu0 %v822
    %v824 = vpop.xlane.xlu0 %823
    %v825 = vsel %vm449, %v446, 0.0
    %826 = vadd.xlane.f32.xlu0 %v825
    %v827 = vpop.xlane.xlu0 %826
    %v828 = vsel %vm449, %v447, 0.0
    %829 = vadd.xlane.f32.xlu0 %v828
    %v830 = vpop.xlane.xlu0 %829
    %v831 = vsel %vm449, %v448, 0.0
    %832 = vadd.xlane.f32.xlu0 %v831
    %v833 = vpop.xlane.xlu0 %832
    %v962 = vlaneseq
    %v963 = vand.u32 %v962, 127
    %v964 = vlaneseq
    %v965 = vshrl.u32 %v964, 7
    %v966 = vsub.s32 %v963, %v965
    %v967 = vrot.slane %v452, %v966
    %v968 = vadd.s32 %v963, 4294967288
    %v969 = vlaneseq
    %v970 = vshrl.u32 %v969, 7
    %v971 = vsub.s32 %v968, %v970
    %v972 = vrot.slane %v455, %v971
    %vm973 = vcmask 130112
    %v974 = vsel %vm973, %v972, %v967
    %v975 = vadd.s32 %v963, 4294967280
    %v976 = vlaneseq
    %v977 = vshrl.u32 %v976, 7
    %v978 = vsub.s32 %v975, %v977
    %v979 = vrot.slane %v458, %v978
    %vm980 = vcmask 195712
    %v981 = vsel %vm980, %v979, %v974
    %v982 = vadd.s32 %v963, 4294967272
    %v983 = vlaneseq
    %v984 = vshrl.u32 %v983, 7
    %v985 = vsub.s32 %v982, %v984
    %v986 = vrot.slane %v461, %v985
    %vm987 = vcmask 261312
    %v988 = vsel %vm987, %v986, %v981
    %v989 = vadd.s32 %v963, 4294967264
    %v990 = vlaneseq
    %v991 = vshrl.u32 %v990, 7
    %v992 = vsub.s32 %v989, %v991
    %v993 = vrot.slane %v464, %v992
    %vm994 = vcmask 326912
    %v995 = vsel %vm994, %v993, %v988
    %v996 = vadd.s32 %v963, 4294967256
    %v997 = vlaneseq
    %v998 = vshrl.u32 %v997, 7
    %v999 = vsub.s32 %v996, %v998
    %v1000 = vrot.slane %v467, %v999
    %vm1001 = vcmask 392512
    %v1002 = vsel %vm1001, %v1000, %v995
    %v1003 = vadd.s32 %v963, 4294967248
    %v1004 = vlaneseq
    %v1005 = vshrl.u32 %v1004, 7
    %v1006 = vsub.s32 %v1003, %v1005
    %v1007 = vrot.slane %v470, %v1006
    %vm1008 = vcmask 458112
    %v1009 = vsel %vm1008, %v1007, %v1002
    %v1010 = vadd.s32 %v963, 4294967240
    %v1011 = vlaneseq
    %v1012 = vshrl.u32 %v1011, 7
    %v1013 = vsub.s32 %v1010, %v1012
    %v1014 = vrot.slane %v473, %v1013
    %vm1015 = vcmask 523712
    %v1016 = vsel %vm1015, %v1014, %v1009
    %v1017 = vadd.s32 %v963, 4294967232
    %v1018 = vlaneseq
    %v1019 = vshrl.u32 %v1018, 7
    %v1020 = vsub.s32 %v1017, %v1019
    %v1021 = vrot.slane %v476, %v1020
    %vm1022 = vcmask 589312
    %v1023 = vsel %vm1022, %v1021, %v1016
    %v1024 = vadd.s32 %v963, 4294967224
    %v1025 = vlaneseq
    %v1026 = vshrl.u32 %v1025, 7
    %v1027 = vsub.s32 %v1024, %v1026
    %v1028 = vrot.slane %v479, %v1027
    %vm1029 = vcmask 654912
    %v1030 = vsel %vm1029, %v1028, %v1023
    %v1031 = vadd.s32 %v963, 4294967216
    %v1032 = vlaneseq
    %v1033 = vshrl.u32 %v1032, 7
    %v1034 = vsub.s32 %v1031, %v1033
    %v1035 = vrot.slane %v482, %v1034
    %vm1036 = vcmask 720512
    %v1037 = vsel %vm1036, %v1035, %v1030
    %v1038 = vadd.s32 %v963, 4294967208
    %v1039 = vlaneseq
    %v1040 = vshrl.u32 %v1039, 7
    %v1041 = vsub.s32 %v1038, %v1040
    %v1042 = vrot.slane %v485, %v1041
    %vm1043 = vcmask 786112
    %v1044 = vsel %vm1043, %v1042, %v1037
    %v1045 = vadd.s32 %v963, 4294967200
    %v1046 = vlaneseq
    %v1047 = vshrl.u32 %v1046, 7
    %v1048 = vsub.s32 %v1045, %v1047
    %v1049 = vrot.slane %v488, %v1048
    %vm1050 = vcmask 851712
    %v1051 = vsel %vm1050, %v1049, %v1044
    %v1052 = vadd.s32 %v963, 4294967192
    %v1053 = vlaneseq
    %v1054 = vshrl.u32 %v1053, 7
    %v1055 = vsub.s32 %v1052, %v1054
    %v1056 = vrot.slane %v491, %v1055
    %vm1057 = vcmask 917312
    %v1058 = vsel %vm1057, %v1056, %v1051
    %v1059 = vadd.s32 %v963, 4294967184
    %v1060 = vlaneseq
    %v1061 = vshrl.u32 %v1060, 7
    %v1062 = vsub.s32 %v1059, %v1061
    %v1063 = vrot.slane %v494, %v1062
    %vm1064 = vcmask 982912
    %v1065 = vsel %vm1064, %v1063, %v1058
    %v1066 = vadd.s32 %v963, 4294967176
    %v1067 = vlaneseq
    %v1068 = vshrl.u32 %v1067, 7
    %v1069 = vsub.s32 %v1066, %v1068
    %v1070 = vrot.slane %v497, %v1069
    %vm1071 = vcmask 1048512
    %v1072 = vsel %vm1071, %v1070, %v1065
    %v1073 = vlaneseq
    %v1074 = vshrl.u32 %v1073, 7
    %v1075 = vsub.s32 %v963, %v1074
    %v1076 = vrot.slane %v500, %v1075
    %v1077 = vlaneseq
    %v1078 = vshrl.u32 %v1077, 7
    %v1079 = vsub.s32 %v968, %v1078
    %v1080 = vrot.slane %v503, %v1079
    %v1081 = vsel %vm973, %v1080, %v1076
    %v1082 = vlaneseq
    %v1083 = vshrl.u32 %v1082, 7
    %v1084 = vsub.s32 %v975, %v1083
    %v1085 = vrot.slane %v506, %v1084
    %v1086 = vsel %vm980, %v1085, %v1081
    %v1087 = vlaneseq
    %v1088 = vshrl.u32 %v1087, 7
    %v1089 = vsub.s32 %v982, %v1088
    %v1090 = vrot.slane %v509, %v1089
    %v1091 = vsel %vm987, %v1090, %v1086
    %v1092 = vlaneseq
    %v1093 = vshrl.u32 %v1092, 7
    %v1094 = vsub.s32 %v989, %v1093
    %v1095 = vrot.slane %v512, %v1094
    %v1096 = vsel %vm994, %v1095, %v1091
    %v1097 = vlaneseq
    %v1098 = vshrl.u32 %v1097, 7
    %v1099 = vsub.s32 %v996, %v1098
    %v1100 = vrot.slane %v515, %v1099
    %v1101 = vsel %vm1001, %v1100, %v1096
    %v1102 = vlaneseq
    %v1103 = vshrl.u32 %v1102, 7
    %v1104 = vsub.s32 %v1003, %v1103
    %v1105 = vrot.slane %v518, %v1104
    %v1106 = vsel %vm1008, %v1105, %v1101
    %v1107 = vlaneseq
    %v1108 = vshrl.u32 %v1107, 7
    %v1109 = vsub.s32 %v1010, %v1108
    %v1110 = vrot.slane %v521, %v1109
    %v1111 = vsel %vm1015, %v1110, %v1106
    %v1112 = vlaneseq
    %v1113 = vshrl.u32 %v1112, 7
    %v1114 = vsub.s32 %v1017, %v1113
    %v1115 = vrot.slane %v524, %v1114
    %v1116 = vsel %vm1022, %v1115, %v1111
    %v1117 = vlaneseq
    %v1118 = vshrl.u32 %v1117, 7
    %v1119 = vsub.s32 %v1024, %v1118
    %v1120 = vrot.slane %v527, %v1119
    %v1121 = vsel %vm1029, %v1120, %v1116
    %v1122 = vlaneseq
    %v1123 = vshrl.u32 %v1122, 7
    %v1124 = vsub.s32 %v1031, %v1123
    %v1125 = vrot.slane %v530, %v1124
    %v1126 = vsel %vm1036, %v1125, %v1121
    %v1127 = vlaneseq
    %v1128 = vshrl.u32 %v1127, 7
    %v1129 = vsub.s32 %v1038, %v1128
    %v1130 = vrot.slane %v533, %v1129
    %v1131 = vsel %vm1043, %v1130, %v1126
    %v1132 = vlaneseq
    %v1133 = vshrl.u32 %v1132, 7
    %v1134 = vsub.s32 %v1045, %v1133
    %v1135 = vrot.slane %v536, %v1134
    %v1136 = vsel %vm1050, %v1135, %v1131
    %v1137 = vlaneseq
    %v1138 = vshrl.u32 %v1137, 7
    %v1139 = vsub.s32 %v1052, %v1138
    %v1140 = vrot.slane %v539, %v1139
    %v1141 = vsel %vm1057, %v1140, %v1136
    %v1142 = vlaneseq
    %v1143 = vshrl.u32 %v1142, 7
    %v1144 = vsub.s32 %v1059, %v1143
    %v1145 = vrot.slane %v542, %v1144
    %v1146 = vsel %vm1064, %v1145, %v1141
    %v1147 = vlaneseq
    %v1148 = vshrl.u32 %v1147, 7
    %v1149 = vsub.s32 %v1066, %v1148
    %v1150 = vrot.slane %v545, %v1149
    %v1151 = vsel %vm1071, %v1150, %v1146
    %v1152 = vlaneseq
    %v1153 = vshrl.u32 %v1152, 7
    %v1154 = vsub.s32 %v963, %v1153
    %v1155 = vrot.slane %v548, %v1154
    %v1156 = vlaneseq
    %v1157 = vshrl.u32 %v1156, 7
    %v1158 = vsub.s32 %v968, %v1157
    %v1159 = vrot.slane %v551, %v1158
    %v1160 = vsel %vm973, %v1159, %v1155
    %v1161 = vlaneseq
    %v1162 = vshrl.u32 %v1161, 7
    %v1163 = vsub.s32 %v975, %v1162
    %v1164 = vrot.slane %v554, %v1163
    %v1165 = vsel %vm980, %v1164, %v1160
    %v1166 = vlaneseq
    %v1167 = vshrl.u32 %v1166, 7
    %v1168 = vsub.s32 %v982, %v1167
    %v1169 = vrot.slane %v557, %v1168
    %v1170 = vsel %vm987, %v1169, %v1165
    %v1171 = vlaneseq
    %v1172 = vshrl.u32 %v1171, 7
    %v1173 = vsub.s32 %v989, %v1172
    %v1174 = vrot.slane %v560, %v1173
    %v1175 = vsel %vm994, %v1174, %v1170
    %v1176 = vlaneseq
    %v1177 = vshrl.u32 %v1176, 7
    %v1178 = vsub.s32 %v996, %v1177
    %v1179 = vrot.slane %v563, %v1178
    %v1180 = vsel %vm1001, %v1179, %v1175
    %v1181 = vlaneseq
    %v1182 = vshrl.u32 %v1181, 7
    %v1183 = vsub.s32 %v1003, %v1182
    %v1184 = vrot.slane %v566, %v1183
    %v1185 = vsel %vm1008, %v1184, %v1180
    %v1186 = vlaneseq
    %v1187 = vshrl.u32 %v1186, 7
    %v1188 = vsub.s32 %v1010, %v1187
    %v1189 = vrot.slane %v569, %v1188
    %v1190 = vsel %vm1015, %v1189, %v1185
    %v1191 = vlaneseq
    %v1192 = vshrl.u32 %v1191, 7
    %v1193 = vsub.s32 %v1017, %v1192
    %v1194 = vrot.slane %v572, %v1193
    %v1195 = vsel %vm1022, %v1194, %v1190
    %v1196 = vlaneseq
    %v1197 = vshrl.u32 %v1196, 7
    %v1198 = vsub.s32 %v1024, %v1197
    %v1199 = vrot.slane %v575, %v1198
    %v1200 = vsel %vm1029, %v1199, %v1195
    %v1201 = vlaneseq
    %v1202 = vshrl.u32 %v1201, 7
    %v1203 = vsub.s32 %v1031, %v1202
    %v1204 = vrot.slane %v578, %v1203
    %v1205 = vsel %vm1036, %v1204, %v1200
    %v1206 = vlaneseq
    %v1207 = vshrl.u32 %v1206, 7
    %v1208 = vsub.s32 %v1038, %v1207
    %v1209 = vrot.slane %v581, %v1208
    %v1210 = vsel %vm1043, %v1209, %v1205
    %v1211 = vlaneseq
    %v1212 = vshrl.u32 %v1211, 7
    %v1213 = vsub.s32 %v1045, %v1212
    %v1214 = vrot.slane %v584, %v1213
    %v1215 = vsel %vm1050, %v1214, %v1210
    %v1216 = vlaneseq
    %v1217 = vshrl.u32 %v1216, 7
    %v1218 = vsub.s32 %v1052, %v1217
    %v1219 = vrot.slane %v587, %v1218
    %v1220 = vsel %vm1057, %v1219, %v1215
    %v1221 = vlaneseq
    %v1222 = vshrl.u32 %v1221, 7
    %v1223 = vsub.s32 %v1059, %v1222
    %v1224 = vrot.slane %v590, %v1223
    %v1225 = vsel %vm1064, %v1224, %v1220
    %v1226 = vlaneseq
    %v1227 = vshrl.u32 %v1226, 7
    %v1228 = vsub.s32 %v1066, %v1227
    %v1229 = vrot.slane %v593, %v1228
    %v1230 = vsel %vm1071, %v1229, %v1225
    %v1231 = vlaneseq
    %v1232 = vshrl.u32 %v1231, 7
    %v1233 = vsub.s32 %v963, %v1232
    %v1234 = vrot.slane %v596, %v1233
    %v1235 = vlaneseq
    %v1236 = vshrl.u32 %v1235, 7
    %v1237 = vsub.s32 %v968, %v1236
    %v1238 = vrot.slane %v599, %v1237
    %v1239 = vsel %vm973, %v1238, %v1234
    %v1240 = vlaneseq
    %v1241 = vshrl.u32 %v1240, 7
    %v1242 = vsub.s32 %v975, %v1241
    %v1243 = vrot.slane %v602, %v1242
    %v1244 = vsel %vm980, %v1243, %v1239
    %v1245 = vlaneseq
    %v1246 = vshrl.u32 %v1245, 7
    %v1247 = vsub.s32 %v982, %v1246
    %v1248 = vrot.slane %v605, %v1247
    %v1249 = vsel %vm987, %v1248, %v1244
    %v1250 = vlaneseq
    %v1251 = vshrl.u32 %v1250, 7
    %v1252 = vsub.s32 %v989, %v1251
    %v1253 = vrot.slane %v608, %v1252
    %v1254 = vsel %vm994, %v1253, %v1249
    %v1255 = vlaneseq
    %v1256 = vshrl.u32 %v1255, 7
    %v1257 = vsub.s32 %v996, %v1256
    %v1258 = vrot.slane %v611, %v1257
    %v1259 = vsel %vm1001, %v1258, %v1254
    %v1260 = vlaneseq
    %v1261 = vshrl.u32 %v1260, 7
    %v1262 = vsub.s32 %v1003, %v1261
    %v1263 = vrot.slane %v614, %v1262
    %v1264 = vsel %vm1008, %v1263, %v1259
    %v1265 = vlaneseq
    %v1266 = vshrl.u32 %v1265, 7
    %v1267 = vsub.s32 %v1010, %v1266
    %v1268 = vrot.slane %v617, %v1267
    %v1269 = vsel %vm1015, %v1268, %v1264
    %v1270 = vlaneseq
    %v1271 = vshrl.u32 %v1270, 7
    %v1272 = vsub.s32 %v1017, %v1271
    %v1273 = vrot.slane %v620, %v1272
    %v1274 = vsel %vm1022, %v1273, %v1269
    %v1275 = vlaneseq
    %v1276 = vshrl.u32 %v1275, 7
    %v1277 = vsub.s32 %v1024, %v1276
    %v1278 = vrot.slane %v623, %v1277
    %v1279 = vsel %vm1029, %v1278, %v1274
    %v1280 = vlaneseq
    %v1281 = vshrl.u32 %v1280, 7
    %v1282 = vsub.s32 %v1031, %v1281
    %v1283 = vrot.slane %v626, %v1282
    %v1284 = vsel %vm1036, %v1283, %v1279
    %v1285 = vlaneseq
    %v1286 = vshrl.u32 %v1285, 7
    %v1287 = vsub.s32 %v1038, %v1286
    %v1288 = vrot.slane %v629, %v1287
    %v1289 = vsel %vm1043, %v1288, %v1284
    %v1290 = vlaneseq
    %v1291 = vshrl.u32 %v1290, 7
    %v1292 = vsub.s32 %v1045, %v1291
    %v1293 = vrot.slane %v632, %v1292
    %v1294 = vsel %vm1050, %v1293, %v1289
    %v1295 = vlaneseq
    %v1296 = vshrl.u32 %v1295, 7
    %v1297 = vsub.s32 %v1052, %v1296
    %v1298 = vrot.slane %v635, %v1297
    %v1299 = vsel %vm1057, %v1298, %v1294
    %v1300 = vlaneseq
    %v1301 = vshrl.u32 %v1300, 7
    %v1302 = vsub.s32 %v1059, %v1301
    %v1303 = vrot.slane %v638, %v1302
    %v1304 = vsel %vm1064, %v1303, %v1299
    %v1305 = vlaneseq
    %v1306 = vshrl.u32 %v1305, 7
    %v1307 = vsub.s32 %v1066, %v1306
    %v1308 = vrot.slane %v641, %v1307
    %v1309 = vsel %vm1071, %v1308, %v1304
    %v1310 = vlaneseq
    %v1311 = vshrl.u32 %v1310, 7
    %v1312 = vsub.s32 %v963, %v1311
    %v1313 = vrot.slane %v644, %v1312
    %v1314 = vlaneseq
    %v1315 = vshrl.u32 %v1314, 7
    %v1316 = vsub.s32 %v968, %v1315
    %v1317 = vrot.slane %v647, %v1316
    %v1318 = vsel %vm973, %v1317, %v1313
    %v1319 = vlaneseq
    %v1320 = vshrl.u32 %v1319, 7
    %v1321 = vsub.s32 %v975, %v1320
    %v1322 = vrot.slane %v650, %v1321
    %v1323 = vsel %vm980, %v1322, %v1318
    %v1324 = vlaneseq
    %v1325 = vshrl.u32 %v1324, 7
    %v1326 = vsub.s32 %v982, %v1325
    %v1327 = vrot.slane %v653, %v1326
    %v1328 = vsel %vm987, %v1327, %v1323
    %v1329 = vlaneseq
    %v1330 = vshrl.u32 %v1329, 7
    %v1331 = vsub.s32 %v989, %v1330
    %v1332 = vrot.slane %v656, %v1331
    %v1333 = vsel %vm994, %v1332, %v1328
    %v1334 = vlaneseq
    %v1335 = vshrl.u32 %v1334, 7
    %v1336 = vsub.s32 %v996, %v1335
    %v1337 = vrot.slane %v659, %v1336
    %v1338 = vsel %vm1001, %v1337, %v1333
    %v1339 = vlaneseq
    %v1340 = vshrl.u32 %v1339, 7
    %v1341 = vsub.s32 %v1003, %v1340
    %v1342 = vrot.slane %v662, %v1341
    %v1343 = vsel %vm1008, %v1342, %v1338
    %v1344 = vlaneseq
    %v1345 = vshrl.u32 %v1344, 7
    %v1346 = vsub.s32 %v1010, %v1345
    %v1347 = vrot.slane %v665, %v1346
    %v1348 = vsel %vm1015, %v1347, %v1343
    %v1349 = vlaneseq
    %v1350 = vshrl.u32 %v1349, 7
    %v1351 = vsub.s32 %v1017, %v1350
    %v1352 = vrot.slane %v668, %v1351
    %v1353 = vsel %vm1022, %v1352, %v1348
    %v1354 = vlaneseq
    %v1355 = vshrl.u32 %v1354, 7
    %v1356 = vsub.s32 %v1024, %v1355
    %v1357 = vrot.slane %v671, %v1356
    %v1358 = vsel %vm1029, %v1357, %v1353
    %v1359 = vlaneseq
    %v1360 = vshrl.u32 %v1359, 7
    %v1361 = vsub.s32 %v1031, %v1360
    %v1362 = vrot.slane %v674, %v1361
    %v1363 = vsel %vm1036, %v1362, %v1358
    %v1364 = vlaneseq
    %v1365 = vshrl.u32 %v1364, 7
    %v1366 = vsub.s32 %v1038, %v1365
    %v1367 = vrot.slane %v677, %v1366
    %v1368 = vsel %vm1043, %v1367, %v1363
    %v1369 = vlaneseq
    %v1370 = vshrl.u32 %v1369, 7
    %v1371 = vsub.s32 %v1045, %v1370
    %v1372 = vrot.slane %v680, %v1371
    %v1373 = vsel %vm1050, %v1372, %v1368
    %v1374 = vlaneseq
    %v1375 = vshrl.u32 %v1374, 7
    %v1376 = vsub.s32 %v1052, %v1375
    %v1377 = vrot.slane %v683, %v1376
    %v1378 = vsel %vm1057, %v1377, %v1373
    %v1379 = vlaneseq
    %v1380 = vshrl.u32 %v1379, 7
    %v1381 = vsub.s32 %v1059, %v1380
    %v1382 = vrot.slane %v686, %v1381
    %v1383 = vsel %vm1064, %v1382, %v1378
    %v1384 = vlaneseq
    %v1385 = vshrl.u32 %v1384, 7
    %v1386 = vsub.s32 %v1066, %v1385
    %v1387 = vrot.slane %v689, %v1386
    %v1388 = vsel %vm1071, %v1387, %v1383
    %v1389 = vlaneseq
    %v1390 = vshrl.u32 %v1389, 7
    %v1391 = vsub.s32 %v963, %v1390
    %v1392 = vrot.slane %v692, %v1391
    %v1393 = vlaneseq
    %v1394 = vshrl.u32 %v1393, 7
    %v1395 = vsub.s32 %v968, %v1394
    %v1396 = vrot.slane %v695, %v1395
    %v1397 = vsel %vm973, %v1396, %v1392
    %v1398 = vlaneseq
    %v1399 = vshrl.u32 %v1398, 7
    %v1400 = vsub.s32 %v975, %v1399
    %v1401 = vrot.slane %v698, %v1400
    %v1402 = vsel %vm980, %v1401, %v1397
    %v1403 = vlaneseq
    %v1404 = vshrl.u32 %v1403, 7
    %v1405 = vsub.s32 %v982, %v1404
    %v1406 = vrot.slane %v701, %v1405
    %v1407 = vsel %vm987, %v1406, %v1402
    %v1408 = vlaneseq
    %v1409 = vshrl.u32 %v1408, 7
    %v1410 = vsub.s32 %v989, %v1409
    %v1411 = vrot.slane %v704, %v1410
    %v1412 = vsel %vm994, %v1411, %v1407
    %v1413 = vlaneseq
    %v1414 = vshrl.u32 %v1413, 7
    %v1415 = vsub.s32 %v996, %v1414
    %v1416 = vrot.slane %v707, %v1415
    %v1417 = vsel %vm1001, %v1416, %v1412
    %v1418 = vlaneseq
    %v1419 = vshrl.u32 %v1418, 7
    %v1420 = vsub.s32 %v1003, %v1419
    %v1421 = vrot.slane %v710, %v1420
    %v1422 = vsel %vm1008, %v1421, %v1417
    %v1423 = vlaneseq
    %v1424 = vshrl.u32 %v1423, 7
    %v1425 = vsub.s32 %v1010, %v1424
    %v1426 = vrot.slane %v713, %v1425
    %v1427 = vsel %vm1015, %v1426, %v1422
    %v1428 = vlaneseq
    %v1429 = vshrl.u32 %v1428, 7
    %v1430 = vsub.s32 %v1017, %v1429
    %v1431 = vrot.slane %v716, %v1430
    %v1432 = vsel %vm1022, %v1431, %v1427
    %v1433 = vlaneseq
    %v1434 = vshrl.u32 %v1433, 7
    %v1435 = vsub.s32 %v1024, %v1434
    %v1436 = vrot.slane %v719, %v1435
    %v1437 = vsel %vm1029, %v1436, %v1432
    %v1438 = vlaneseq
    %v1439 = vshrl.u32 %v1438, 7
    %v1440 = vsub.s32 %v1031, %v1439
    %v1441 = vrot.slane %v722, %v1440
    %v1442 = vsel %vm1036, %v1441, %v1437
    %v1443 = vlaneseq
    %v1444 = vshrl.u32 %v1443, 7
    %v1445 = vsub.s32 %v1038, %v1444
    %v1446 = vrot.slane %v725, %v1445
    %v1447 = vsel %vm1043, %v1446, %v1442
    %v1448 = vlaneseq
    %v1449 = vshrl.u32 %v1448, 7
    %v1450 = vsub.s32 %v1045, %v1449
    %v1451 = vrot.slane %v728, %v1450
    %v1452 = vsel %vm1050, %v1451, %v1447
    %v1453 = vlaneseq
    %v1454 = vshrl.u32 %v1453, 7
    %v1455 = vsub.s32 %v1052, %v1454
    %v1456 = vrot.slane %v731, %v1455
    %v1457 = vsel %vm1057, %v1456, %v1452
    %v1458 = vlaneseq
    %v1459 = vshrl.u32 %v1458, 7
    %v1460 = vsub.s32 %v1059, %v1459
    %v1461 = vrot.slane %v734, %v1460
    %v1462 = vsel %vm1064, %v1461, %v1457
    %v1463 = vlaneseq
    %v1464 = vshrl.u32 %v1463, 7
    %v1465 = vsub.s32 %v1066, %v1464
    %v1466 = vrot.slane %v737, %v1465
    %v1467 = vsel %vm1071, %v1466, %v1462
    %v1468 = vlaneseq
    %v1469 = vshrl.u32 %v1468, 7
    %v1470 = vsub.s32 %v963, %v1469
    %v1471 = vrot.slane %v740, %v1470
    %v1472 = vlaneseq
    %v1473 = vshrl.u32 %v1472, 7
    %v1474 = vsub.s32 %v968, %v1473
    %v1475 = vrot.slane %v743, %v1474
    %v1476 = vsel %vm973, %v1475, %v1471
    %v1477 = vlaneseq
    %v1478 = vshrl.u32 %v1477, 7
    %v1479 = vsub.s32 %v975, %v1478
    %v1480 = vrot.slane %v746, %v1479
    %v1481 = vsel %vm980, %v1480, %v1476
    %v1482 = vlaneseq
    %v1483 = vshrl.u32 %v1482, 7
    %v1484 = vsub.s32 %v982, %v1483
    %v1485 = vrot.slane %v749, %v1484
    %v1486 = vsel %vm987, %v1485, %v1481
    %v1487 = vlaneseq
    %v1488 = vshrl.u32 %v1487, 7
    %v1489 = vsub.s32 %v989, %v1488
    %v1490 = vrot.slane %v752, %v1489
    %v1491 = vsel %vm994, %v1490, %v1486
    %v1492 = vlaneseq
    %v1493 = vshrl.u32 %v1492, 7
    %v1494 = vsub.s32 %v996, %v1493
    %v1495 = vrot.slane %v755, %v1494
    %v1496 = vsel %vm1001, %v1495, %v1491
    %v1497 = vlaneseq
    %v1498 = vshrl.u32 %v1497, 7
    %v1499 = vsub.s32 %v1003, %v1498
    %v1500 = vrot.slane %v758, %v1499
    %v1501 = vsel %vm1008, %v1500, %v1496
    %v1502 = vlaneseq
    %v1503 = vshrl.u32 %v1502, 7
    %v1504 = vsub.s32 %v1010, %v1503
    %v1505 = vrot.slane %v761, %v1504
    %v1506 = vsel %vm1015, %v1505, %v1501
    %v1507 = vlaneseq
    %v1508 = vshrl.u32 %v1507, 7
    %v1509 = vsub.s32 %v1017, %v1508
    %v1510 = vrot.slane %v764, %v1509
    %v1511 = vsel %vm1022, %v1510, %v1506
    %v1512 = vlaneseq
    %v1513 = vshrl.u32 %v1512, 7
    %v1514 = vsub.s32 %v1024, %v1513
    %v1515 = vrot.slane %v767, %v1514
    %v1516 = vsel %vm1029, %v1515, %v1511
    %v1517 = vlaneseq
    %v1518 = vshrl.u32 %v1517, 7
    %v1519 = vsub.s32 %v1031, %v1518
    %v1520 = vrot.slane %v770, %v1519
    %v1521 = vsel %vm1036, %v1520, %v1516
    %v1522 = vlaneseq
    %v1523 = vshrl.u32 %v1522, 7
    %v1524 = vsub.s32 %v1038, %v1523
    %v1525 = vrot.slane %v773, %v1524
    %v1526 = vsel %vm1043, %v1525, %v1521
    %v1527 = vlaneseq
    %v1528 = vshrl.u32 %v1527, 7
    %v1529 = vsub.s32 %v1045, %v1528
    %v1530 = vrot.slane %v776, %v1529
    %v1531 = vsel %vm1050, %v1530, %v1526
    %v1532 = vlaneseq
    %v1533 = vshrl.u32 %v1532, 7
    %v1534 = vsub.s32 %v1052, %v1533
    %v1535 = vrot.slane %v779, %v1534
    %v1536 = vsel %vm1057, %v1535, %v1531
    %v1537 = vlaneseq
    %v1538 = vshrl.u32 %v1537, 7
    %v1539 = vsub.s32 %v1059, %v1538
    %v1540 = vrot.slane %v782, %v1539
    %v1541 = vsel %vm1064, %v1540, %v1536
    %v1542 = vlaneseq
    %v1543 = vshrl.u32 %v1542, 7
    %v1544 = vsub.s32 %v1066, %v1543
    %v1545 = vrot.slane %v785, %v1544
    %v1546 = vsel %vm1071, %v1545, %v1541
    %v1547 = vlaneseq
    %v1548 = vshrl.u32 %v1547, 7
    %v1549 = vsub.s32 %v963, %v1548
    %v1550 = vrot.slane %v788, %v1549
    %v1551 = vlaneseq
    %v1552 = vshrl.u32 %v1551, 7
    %v1553 = vsub.s32 %v968, %v1552
    %v1554 = vrot.slane %v791, %v1553
    %v1555 = vsel %vm973, %v1554, %v1550
    %v1556 = vlaneseq
    %v1557 = vshrl.u32 %v1556, 7
    %v1558 = vsub.s32 %v975, %v1557
    %v1559 = vrot.slane %v794, %v1558
    %v1560 = vsel %vm980, %v1559, %v1555
    %v1561 = vlaneseq
    %v1562 = vshrl.u32 %v1561, 7
    %v1563 = vsub.s32 %v982, %v1562
    %v1564 = vrot.slane %v797, %v1563
    %v1565 = vsel %vm987, %v1564, %v1560
    %v1566 = vlaneseq
    %v1567 = vshrl.u32 %v1566, 7
    %v1568 = vsub.s32 %v989, %v1567
    %v1569 = vrot.slane %v800, %v1568
    %v1570 = vsel %vm994, %v1569, %v1565
    %v1571 = vlaneseq
    %v1572 = vshrl.u32 %v1571, 7
    %v1573 = vsub.s32 %v996, %v1572
    %v1574 = vrot.slane %v803, %v1573
    %v1575 = vsel %vm1001, %v1574, %v1570
    %v1576 = vlaneseq
    %v1577 = vshrl.u32 %v1576, 7
    %v1578 = vsub.s32 %v1003, %v1577
    %v1579 = vrot.slane %v806, %v1578
    %v1580 = vsel %vm1008, %v1579, %v1575
    %v1581 = vlaneseq
    %v1582 = vshrl.u32 %v1581, 7
    %v1583 = vsub.s32 %v1010, %v1582
    %v1584 = vrot.slane %v809, %v1583
    %v1585 = vsel %vm1015, %v1584, %v1580
    %v1586 = vlaneseq
    %v1587 = vshrl.u32 %v1586, 7
    %v1588 = vsub.s32 %v1017, %v1587
    %v1589 = vrot.slane %v812, %v1588
    %v1590 = vsel %vm1022, %v1589, %v1585
    %v1591 = vlaneseq
    %v1592 = vshrl.u32 %v1591, 7
    %v1593 = vsub.s32 %v1024, %v1592
    %v1594 = vrot.slane %v815, %v1593
    %v1595 = vsel %vm1029, %v1594, %v1590
    %v1596 = vlaneseq
    %v1597 = vshrl.u32 %v1596, 7
    %v1598 = vsub.s32 %v1031, %v1597
    %v1599 = vrot.slane %v818, %v1598
    %v1600 = vsel %vm1036, %v1599, %v1595
    %v1601 = vlaneseq
    %v1602 = vshrl.u32 %v1601, 7
    %v1603 = vsub.s32 %v1038, %v1602
    %v1604 = vrot.slane %v821, %v1603
    %v1605 = vsel %vm1043, %v1604, %v1600
    %v1606 = vlaneseq
    %v1607 = vshrl.u32 %v1606, 7
    %v1608 = vsub.s32 %v1045, %v1607
    %v1609 = vrot.slane %v824, %v1608
    %v1610 = vsel %vm1050, %v1609, %v1605
    %v1611 = vlaneseq
    %v1612 = vshrl.u32 %v1611, 7
    %v1613 = vsub.s32 %v1052, %v1612
    %v1614 = vrot.slane %v827, %v1613
    %v1615 = vsel %vm1057, %v1614, %v1610
    %v1616 = vlaneseq
    %v1617 = vshrl.u32 %v1616, 7
    %v1618 = vsub.s32 %v1059, %v1617
    %v1619 = vrot.slane %v830, %v1618
    %v1620 = vsel %vm1064, %v1619, %v1615
    %v1621 = vlaneseq
    %v1622 = vshrl.u32 %v1621, 7
    %v1623 = vsub.s32 %v1066, %v1622
    %v1624 = vrot.slane %v833, %v1623
    %v1625 = vsel %vm1071, %v1624, %v1620
    %vm1626 = vcmask 1041409
    %v1627 = vsel %vm1626, %v1151, %v1072
    %vm1628 = vcmask 1042434
    %v1629 = vsel %vm1628, %v1230, %v1627
    %vm1630 = vcmask 1043459
    %v1631 = vsel %vm1630, %v1309, %v1629
    %vm1632 = vcmask 1044484
    %v1633 = vsel %vm1632, %v1388, %v1631
    %vm1634 = vcmask 1045509
    %v1635 = vsel %vm1634, %v1467, %v1633
    %vm1636 = vcmask 1046534
    %v1637 = vsel %vm1636, %v1546, %v1635
    %vm1638 = vcmask 1047559
    %v1639 = vsel %vm1638, %v1625, %v1637
    %v1641 = vadd.f32 %v52, %v1639
    %1642 = vmax.xlane.f32.xlu0 %v1641
    %v1643 = vpop.xlane.xlu0 %1642
    %v1644 = vsub.f32 %v1641, %v1643
    %v1645 = vmul.f32 %v1644, 1.442695
    %v1646 = vpow.pop %v1645
    %1647 = vadd.xlane.f32.xlu0 %v1646
    %v1648 = vpop.xlane.xlu0 %1647
    %v1649 = vrcp.pop %v1648
    %v1650 = vmul.f32 %v1646, %v1649
    %1651 = vst [vmem:[#allocation8] sm:$0xff] %v1650
    // Predicated region
    $region26: #{tpu_custom_call.1} parent=1 // pred_check
      _
    $region27: #{tpu_custom_call.1} parent=1 // pred_check_branch
      %1653 = sbr.rel (0) target = $region29
    $region28: #{tpu_custom_call.1} parent=1 // pred_region
      %s1655 = ssub.s32 128, 128
      %1656 = vsyncadd [#allocation4], %s1655
      %s1658 = sshll.u32 [#allocation8], 4
      %s1659 = int_to_ptr.vmem [resolvable:$true] %s1658
      %1661 = dma.vmem_to_hbm [thread:$0]  %s1659, 128, %s3, [#allocation4]
    $region29: #{tpu_custom_call.1} parent=1 // pred_fallthru
      _
    // Predicated region
    $region30: #{tpu_custom_call.1} parent=1 // pred_check
      _
    $region31: #{tpu_custom_call.1} parent=1 // pred_check_branch
      %1663 = sbr.rel (0) target = $region33
    $region32: #{tpu_custom_call.1} parent=1 // pred_region
      %1664 = dma.done [#allocation4], 128
    $region33: #{tpu_custom_call.1} parent=1 // pred_fallthru
      _
    %1665 = vsyncpa [#allocation3], 1
    %1666 = vsyncpa [#allocation6], 1
    %1667 = vsyncpa [#allocation4], 1

</llo_original>
